<compile_context>
chip_gen: v7x
topology: tpu7x:2x2x1
jax: 0.10.0
libtpu: 0.0.40
codegen_flags: <defaults>
</compile_context>

<pallas_src>
import math
import functools

import jax
import jax.numpy as jnp
from jax.experimental import pallas as pl
from jax.experimental.pallas import tpu as pltpu


# ---------------------------------------------------------------------------
# Fused MHA kernel (TB batch rows per grid step)
# ---------------------------------------------------------------------------

def _mha_kernel(q_ref, k_ref, v_ref,
                wq_ref, wk_ref, wv_ref, wo_ref,
                bq_ref, bk_ref, bv_ref, bo_ref,
                o_ref, ctx_ref, *, n_heads, scale):
    """Blocks: q/k/v/out (TB, S, E); weights (E, E) bf16; biases (1, E) f32.
    ctx_ref: (TB, S, E) f32 VMEM scratch for the merged head contexts."""
    TB, S, E = q_ref.shape
    dh = E // n_heads

    # Flatten (TB, S, E) -> (TB*S, E): fattens the M dim of the projection matmuls.
    xq = q_ref[...].reshape(TB * S, E).astype(jnp.bfloat16)
    xk = k_ref[...].reshape(TB * S, E).astype(jnp.bfloat16)
    xv = v_ref[...].reshape(TB * S, E).astype(jnp.bfloat16)

    # --- Q/K/V projections: bf16 operands on the MXU, f32 accumulation.
    #     Bias add in f32; softmax scale folded into Q (cheaper than scaling scores).
    q = (jnp.dot(xq, wq_ref[...], preferred_element_type=jnp.float32)
         + bq_ref[...]) * scale
    k = jnp.dot(xk, wk_ref[...], preferred_element_type=jnp.float32) + bk_ref[...]
    v = jnp.dot(xv, wv_ref[...], preferred_element_type=jnp.float32) + bv_ref[...]

    q3 = q.reshape(TB, S, E)
    k3 = k.reshape(TB, S, E)
    v3 = v.reshape(TB, S, E)

    # --- Per-head attention.  Heads are contiguous column slices of E, so the
    #     split/merge is pure slicing (no transposes).  Each head's context is
    #     stored straight into the ctx scratch (one store per head, no concat).
    for h in range(n_heads):
        sl = slice(h * dh, (h + 1) * dh)
        qh = q3[..., sl].astype(jnp.bfloat16)                       # (TB, S, dh)
        kh = k3[..., sl].astype(jnp.bfloat16)
        vh = v3[..., sl].astype(jnp.bfloat16)
        # q @ k^T batched over TB, without materializing a transposed K copy.
        s = jnp.einsum("bqd,bkd->bqk", qh, kh,
                       preferred_element_type=jnp.float32)          # (TB, S, S) f32
        m = jnp.max(s, axis=-1, keepdims=True)
        p = jnp.exp(s - m)
        p = p * pl.reciprocal(jnp.sum(p, axis=-1, keepdims=True), approx=False)
        ctx_ref[:, :, sl] = jnp.einsum("bqk,bkd->bqd", p.astype(jnp.bfloat16), vh,
                                       preferred_element_type=jnp.float32)

    # --- Output projection over all heads at once (single lane-dense-ish store).
    ctx = ctx_ref[...].reshape(TB * S, E).astype(jnp.bfloat16)
    out = jnp.dot(ctx, wo_ref[...], preferred_element_type=jnp.float32) + bo_ref[...]
    o_ref[...] = out.reshape(TB, S, E).astype(o_ref.dtype)


# ---------------------------------------------------------------------------
# Wrapper
# ---------------------------------------------------------------------------

def multi_head_attention(query, key, value, params, n_heads, mask=None):
    """Forward pass matching MultiHeadAttention.forward (mask=None, eval mode)."""
    assert mask is None, "mask != None path is not implemented in this kernel"
    B, S, E = query.shape
    assert E % n_heads == 0
    scale = 1.0 / math.sqrt(E // n_heads)

    # Two grid steps when possible so both v7x TensorCores get work; each step
    # processes TB batch rows (amortizes per-step overhead, fattens matmul M).
    grid_b = 2 if (B >= 2 and B % 2 == 0) else 1
    TB = B // grid_b

    row_spec = pl.BlockSpec((TB, S, E), lambda b: (b, 0, 0))
    # Constant index_map -> weights/biases are resident; single-buffer them
    # (default double-buffering would just duplicate the tiles in VMEM).
    w_spec = pl.BlockSpec((E, E), lambda b: (0, 0), pipeline_mode=pl.Buffered(1))
    b_spec = pl.BlockSpec((1, E), lambda b: (0, 0), pipeline_mode=pl.Buffered(1))

    kernel = functools.partial(_mha_kernel, n_heads=n_heads, scale=scale)

    # Advisory cost estimate for XLA's scheduler.
    flops = 8 * B * S * E * E + 4 * B * S * S * E          # 4 projections + attention
    transcendentals = B * n_heads * S * S                  # exp per score element
    bytes_accessed = (4 * B * S * E * query.dtype.itemsize  # q, k, v in + out
                      + 4 * E * E * 2                       # bf16 weights
                      + 4 * E * 4)                          # f32 biases

    # Weights in bf16 (halves weight DMA bytes + VMEM; MXU peak rates are bf16).
    wq = params["wq"].astype(jnp.bfloat16)
    wk = params["wk"].astype(jnp.bfloat16)
    wv = params["wv"].astype(jnp.bfloat16)
    wo = params["wo"].astype(jnp.bfloat16)
    bq = params["bq"].reshape(1, E).astype(jnp.float32)
    bk = params["bk"].reshape(1, E).astype(jnp.float32)
    bv = params["bv"].reshape(1, E).astype(jnp.float32)
    bo = params["bo"].reshape(1, E).astype(jnp.float32)

    return pl.pallas_call(
        kernel,
        out_shape=jax.ShapeDtypeStruct((B, S, E), query.dtype),
        grid=(grid_b,),
        in_specs=[row_spec, row_spec, row_spec,
                  w_spec, w_spec, w_spec, w_spec,
                  b_spec, b_spec, b_spec, b_spec],
        out_specs=row_spec,
        scratch_shapes=[pltpu.VMEM((TB, S, E), jnp.float32)],
        compiler_params=pltpu.CompilerParams(
            dimension_semantics=("parallel",),
            vmem_limit_bytes=32 * 1024 * 1024),
        cost_estimate=pl.CostEstimate(flops=flops,
                                      transcendentals=transcendentals,
                                      bytes_accessed=bytes_accessed),
    )(query, key, value, wq, wk, wv, wo, bq, bk, bv, bo)


# ---------------------------------------------------------------------------
# Reference (pure JAX, f32) for sanity check
# ---------------------------------------------------------------------------

def reference_mha(query, key, value, params, n_heads):
    B, S, E = query.shape
    Dh = E // n_heads
    lin = lambda x, w, b: x @ w + b
    Q = lin(query, params["wq"], params["bq"])
    K = lin(key, params["wk"], params["bk"])
    V = lin(value, params["wv"], params["bv"])
    sh = lambda x: x.reshape(B, S, n_heads, Dh).transpose(0, 2, 1, 3)
    Q, K, V = sh(Q), sh(K), sh(V)
    s = jnp.einsum("bhqd,bhkd->bhqk", Q, K) / math.sqrt(Dh)
    p = jax.nn.softmax(s, axis=-1)
    x = jnp.einsum("bhqk,bhkd->bhqd", p, V)
    x = x.transpose(0, 2, 1, 3).reshape(B, S, E)
    return lin(x, params["wo"], params["bo"])


# ---------------------------------------------------------------------------
# Main
# ---------------------------------------------------------------------------

if __name__ == "__main__":
    # small shapes consistent with the module: batch=2, seq=8, emb_dim=32, n_heads=4
    B, S, E, H = 2, 8, 32, 4

    key0 = jax.random.PRNGKey(0)
    ks = jax.random.split(key0, 11)

    def winit(k, shape, fan_in):
        bound = 1.0 / math.sqrt(fan_in)
        return jax.random.uniform(k, shape, jnp.float32, -bound, bound)

    params = {
        "wq": winit(ks[0], (E, E), E), "bq": winit(ks[1], (E,), E),
        "wk": winit(ks[2], (E, E), E), "bk": winit(ks[3], (E,), E),
        "wv": winit(ks[4], (E, E), E), "bv": winit(ks[5], (E,), E),
        "wo": winit(ks[6], (E, E), E), "bo": winit(ks[7], (E,), E),
    }

    query = jax.random.normal(ks[8], (B, S, E), jnp.float32)
    key_in = jax.random.normal(ks[9], (B, S, E), jnp.float32)
    value = jax.random.normal(ks[10], (B, S, E), jnp.float32)

    out = multi_head_attention(query, key_in, value, params, H)
    out = jax.block_until_ready(out)

    ref = reference_mha(query, key_in, value, params, H)
    assert out.shape == (B, S, E)
    # tolerance accounts for bf16 matmul operands (f32 accumulation) in the kernel
    assert jnp.allclose(out, ref, atol=3e-2, rtol=3e-2), "mismatch vs reference"

    print("KERNEL_OK")
</pallas_src>

<mosaic_0001>
module attributes {stable_mosaic.version = 11 : i64} {
  func.func @_mha_kernel(%arg0: i32, %arg1: memref<1x8x32xf32, #tpu.memory_space<vmem>>, %arg2: memref<1x8x32xf32, #tpu.memory_space<vmem>>, %arg3: memref<1x8x32xf32, #tpu.memory_space<vmem>>, %arg4: memref<32x32xbf16, #tpu.memory_space<vmem>>, %arg5: memref<32x32xbf16, #tpu.memory_space<vmem>>, %arg6: memref<32x32xbf16, #tpu.memory_space<vmem>>, %arg7: memref<32x32xbf16, #tpu.memory_space<vmem>>, %arg8: memref<1x32xf32, #tpu.memory_space<vmem>>, %arg9: memref<1x32xf32, #tpu.memory_space<vmem>>, %arg10: memref<1x32xf32, #tpu.memory_space<vmem>>, %arg11: memref<1x32xf32, #tpu.memory_space<vmem>>, %arg12: memref<1x8x32xf32, #tpu.memory_space<vmem>>, %arg13: memref<1x8x32xf32, #tpu.memory_space<vmem>>) attributes {dimension_semantics = [#tpu.dimension_semantics<parallel>], iteration_bounds = array<i64: 2>, scalar_prefetch = 0 : i64, scratch_operands = 1 : i64, tpu.core_type = #tpu.core_type<tc>, window_params = [{transform_indices = @transform_0, window_bounds = array<i64: 1, 8, 32>}, {transform_indices = @transform_1, window_bounds = array<i64: 1, 8, 32>}, {transform_indices = @transform_2, window_bounds = array<i64: 1, 8, 32>}, {pipeline_mode = #tpu.pipeline_mode<synchronous>, transform_indices = @transform_3, window_bounds = array<i64: 32, 32>}, {pipeline_mode = #tpu.pipeline_mode<synchronous>, transform_indices = @transform_4, window_bounds = array<i64: 32, 32>}, {pipeline_mode = #tpu.pipeline_mode<synchronous>, transform_indices = @transform_5, window_bounds = array<i64: 32, 32>}, {pipeline_mode = #tpu.pipeline_mode<synchronous>, transform_indices = @transform_6, window_bounds = array<i64: 32, 32>}, {pipeline_mode = #tpu.pipeline_mode<synchronous>, transform_indices = @transform_7, window_bounds = array<i64: 1, 32>}, {pipeline_mode = #tpu.pipeline_mode<synchronous>, transform_indices = @transform_8, window_bounds = array<i64: 1, 32>}, {pipeline_mode = #tpu.pipeline_mode<synchronous>, transform_indices = @transform_9, window_bounds = array<i64: 1, 32>}, {pipeline_mode = #tpu.pipeline_mode<synchronous>, transform_indices = @transform_10, window_bounds = array<i64: 1, 32>}, {transform_indices = @transform_11, window_bounds = array<i64: 1, 8, 32>}]} {
    %c0 = arith.constant 0 : index
    %c0_0 = arith.constant 0 : index
    %c0_1 = arith.constant 0 : index
    %0 = vector.load %arg1[%c0, %c0_0, %c0_1] : memref<1x8x32xf32, #tpu.memory_space<vmem>>, vector<1x8x32xf32>
    %1 = vector.shape_cast %0 : vector<1x8x32xf32> to vector<8x32xf32>
    %2 = arith.truncf %1 : vector<8x32xf32> to vector<8x32xbf16>
    %c0_2 = arith.constant 0 : index
    %c0_3 = arith.constant 0 : index
    %c0_4 = arith.constant 0 : index
    %3 = vector.load %arg2[%c0_2, %c0_3, %c0_4] : memref<1x8x32xf32, #tpu.memory_space<vmem>>, vector<1x8x32xf32>
    %4 = vector.shape_cast %3 : vector<1x8x32xf32> to vector<8x32xf32>
    %5 = arith.truncf %4 : vector<8x32xf32> to vector<8x32xbf16>
    %c0_5 = arith.constant 0 : index
    %c0_6 = arith.constant 0 : index
    %c0_7 = arith.constant 0 : index
    %6 = vector.load %arg3[%c0_5, %c0_6, %c0_7] : memref<1x8x32xf32, #tpu.memory_space<vmem>>, vector<1x8x32xf32>
    %7 = vector.shape_cast %6 : vector<1x8x32xf32> to vector<8x32xf32>
    %8 = arith.truncf %7 : vector<8x32xf32> to vector<8x32xbf16>
    %c0_8 = arith.constant 0 : index
    %c0_9 = arith.constant 0 : index
    %9 = vector.load %arg4[%c0_8, %c0_9] : memref<32x32xbf16, #tpu.memory_space<vmem>>, vector<32x32xbf16>
    %cst = arith.constant dense<0.000000e+00> : vector<8x32xf32>
    %10 = tpu.matmul %2, %9, %cst {dimension_numbers = #tpu.dot_dimension_numbers<[1], [0], [0], [1], [0, 0, 1, 1], [], []>} : vector<8x32xbf16>, vector<32x32xbf16>, vector<8x32xf32> -> vector<8x32xf32>
    %c0_10 = arith.constant 0 : index
    %c0_11 = arith.constant 0 : index
    %11 = vector.load %arg8[%c0_10, %c0_11] : memref<1x32xf32, #tpu.memory_space<vmem>>, vector<1x32xf32>
    %12 = vector.broadcast %11 : vector<1x32xf32> to vector<8x32xf32>
    %13 = arith.addf %10, %12 : vector<8x32xf32>
    %cst_12 = arith.constant 0.353553385 : f32
    %14 = vector.broadcast %cst_12 : f32 to vector<8x32xf32>
    %15 = arith.mulf %13, %14 : vector<8x32xf32>
    %c0_13 = arith.constant 0 : index
    %c0_14 = arith.constant 0 : index
    %16 = vector.load %arg5[%c0_13, %c0_14] : memref<32x32xbf16, #tpu.memory_space<vmem>>, vector<32x32xbf16>
    %cst_15 = arith.constant dense<0.000000e+00> : vector<8x32xf32>
    %17 = tpu.matmul %5, %16, %cst_15 {dimension_numbers = #tpu.dot_dimension_numbers<[1], [0], [0], [1], [0, 0, 1, 1], [], []>} : vector<8x32xbf16>, vector<32x32xbf16>, vector<8x32xf32> -> vector<8x32xf32>
    %c0_16 = arith.constant 0 : index
    %c0_17 = arith.constant 0 : index
    %18 = vector.load %arg9[%c0_16, %c0_17] : memref<1x32xf32, #tpu.memory_space<vmem>>, vector<1x32xf32>
    %19 = vector.broadcast %18 : vector<1x32xf32> to vector<8x32xf32>
    %20 = arith.addf %17, %19 : vector<8x32xf32>
    %c0_18 = arith.constant 0 : index
    %c0_19 = arith.constant 0 : index
    %21 = vector.load %arg6[%c0_18, %c0_19] : memref<32x32xbf16, #tpu.memory_space<vmem>>, vector<32x32xbf16>
    %cst_20 = arith.constant dense<0.000000e+00> : vector<8x32xf32>
    %22 = tpu.matmul %8, %21, %cst_20 {dimension_numbers = #tpu.dot_dimension_numbers<[1], [0], [0], [1], [0, 0, 1, 1], [], []>} : vector<8x32xbf16>, vector<32x32xbf16>, vector<8x32xf32> -> vector<8x32xf32>
    %c0_21 = arith.constant 0 : index
    %c0_22 = arith.constant 0 : index
    %23 = vector.load %arg10[%c0_21, %c0_22] : memref<1x32xf32, #tpu.memory_space<vmem>>, vector<1x32xf32>
    %24 = vector.broadcast %23 : vector<1x32xf32> to vector<8x32xf32>
    %25 = arith.addf %22, %24 : vector<8x32xf32>
    %26 = vector.shape_cast %15 : vector<8x32xf32> to vector<1x8x32xf32>
    %27 = vector.shape_cast %20 : vector<8x32xf32> to vector<1x8x32xf32>
    %28 = vector.shape_cast %25 : vector<8x32xf32> to vector<1x8x32xf32>
    %29 = vector.extract_strided_slice %26 {offsets = [0, 0, 0], sizes = [1, 8, 8], strides = [1, 1, 1]} : vector<1x8x32xf32> to vector<1x8x8xf32>
    %30 = arith.truncf %29 : vector<1x8x8xf32> to vector<1x8x8xbf16>
    %31 = vector.extract_strided_slice %27 {offsets = [0, 0, 0], sizes = [1, 8, 8], strides = [1, 1, 1]} : vector<1x8x32xf32> to vector<1x8x8xf32>
    %32 = arith.truncf %31 : vector<1x8x8xf32> to vector<1x8x8xbf16>
    %33 = vector.extract_strided_slice %28 {offsets = [0, 0, 0], sizes = [1, 8, 8], strides = [1, 1, 1]} : vector<1x8x32xf32> to vector<1x8x8xf32>
    %34 = arith.truncf %33 : vector<1x8x8xf32> to vector<1x8x8xbf16>
    "tpu.trace_start"() <{level = 10 : i32, message = "bqd,bkd->bqk"}> : () -> ()
    %cst_23 = arith.constant dense<0.000000e+00> : vector<1x8x8xf32>
    %35 = tpu.matmul %30, %32, %cst_23 {dimension_numbers = #tpu.dot_dimension_numbers<[2], [2], [1], [1], [0, 0, 0, 1, 1, 1], [0], [0]>} : vector<1x8x8xbf16>, vector<1x8x8xbf16>, vector<1x8x8xf32> -> vector<1x8x8xf32>
    "tpu.trace_stop"() : () -> ()
    %cst_24 = arith.constant dense<0xFF800000> : vector<1x8xf32>
    %36 = vector.multi_reduction <maximumf>, %35, %cst_24 [2] : vector<1x8x8xf32> to vector<1x8xf32>
    %37 = vector.shape_cast %36 : vector<1x8xf32> to vector<1x8x1xf32>
    %38 = vector.broadcast %37 : vector<1x8x1xf32> to vector<1x8x8xf32>
    %39 = arith.subf %35, %38 : vector<1x8x8xf32>
    %40 = math.exp %39 : vector<1x8x8xf32>
    %cst_25 = arith.constant dense<0.000000e+00> : vector<1x8xf32>
    %41 = vector.multi_reduction <add>, %40, %cst_25 [2] : vector<1x8x8xf32> to vector<1x8xf32>
    %42 = vector.shape_cast %41 : vector<1x8xf32> to vector<1x8x1xf32>
    %43 = tpu.reciprocal %42 : vector<1x8x1xf32> -> vector<1x8x1xf32>
    %44 = vector.broadcast %43 : vector<1x8x1xf32> to vector<1x8x8xf32>
    %45 = arith.mulf %40, %44 : vector<1x8x8xf32>
    %46 = arith.truncf %45 : vector<1x8x8xf32> to vector<1x8x8xbf16>
    "tpu.trace_start"() <{level = 10 : i32, message = "bqk,bkd->bqd"}> : () -> ()
    %cst_26 = arith.constant dense<0.000000e+00> : vector<1x8x8xf32>
    %47 = tpu.matmul %46, %34, %cst_26 {dimension_numbers = #tpu.dot_dimension_numbers<[2], [1], [1], [2], [0, 0, 0, 1, 1, 2], [0], [0]>} : vector<1x8x8xbf16>, vector<1x8x8xbf16>, vector<1x8x8xf32> -> vector<1x8x8xf32>
    "tpu.trace_stop"() : () -> ()
    %c0_27 = arith.constant 0 : index
    %c0_28 = arith.constant 0 : index
    %c0_29 = arith.constant 0 : index
    %48 = vector.load %arg13[%c0_27, %c0_28, %c0_29] : memref<1x8x32xf32, #tpu.memory_space<vmem>>, vector<1x8x8xf32>
    tpu.vector_store %arg13[%c0_27, %c0_28, %c0_29], %47 {strides = array<i32>} : memref<1x8x32xf32, #tpu.memory_space<vmem>>, vector<1x8x8xf32>,
    %49 = vector.extract_strided_slice %26 {offsets = [0, 0, 8], sizes = [1, 8, 8], strides = [1, 1, 1]} : vector<1x8x32xf32> to vector<1x8x8xf32>
    %50 = arith.truncf %49 : vector<1x8x8xf32> to vector<1x8x8xbf16>
    %51 = vector.extract_strided_slice %27 {offsets = [0, 0, 8], sizes = [1, 8, 8], strides = [1, 1, 1]} : vector<1x8x32xf32> to vector<1x8x8xf32>
    %52 = arith.truncf %51 : vector<1x8x8xf32> to vector<1x8x8xbf16>
    %53 = vector.extract_strided_slice %28 {offsets = [0, 0, 8], sizes = [1, 8, 8], strides = [1, 1, 1]} : vector<1x8x32xf32> to vector<1x8x8xf32>
    %54 = arith.truncf %53 : vector<1x8x8xf32> to vector<1x8x8xbf16>
    "tpu.trace_start"() <{level = 10 : i32, message = "bqd,bkd->bqk"}> : () -> ()
    %cst_30 = arith.constant dense<0.000000e+00> : vector<1x8x8xf32>
    %55 = tpu.matmul %50, %52, %cst_30 {dimension_numbers = #tpu.dot_dimension_numbers<[2], [2], [1], [1], [0, 0, 0, 1, 1, 1], [0], [0]>} : vector<1x8x8xbf16>, vector<1x8x8xbf16>, vector<1x8x8xf32> -> vector<1x8x8xf32>
    "tpu.trace_stop"() : () -> ()
    %cst_31 = arith.constant dense<0xFF800000> : vector<1x8xf32>
    %56 = vector.multi_reduction <maximumf>, %55, %cst_31 [2] : vector<1x8x8xf32> to vector<1x8xf32>
    %57 = vector.shape_cast %56 : vector<1x8xf32> to vector<1x8x1xf32>
    %58 = vector.broadcast %57 : vector<1x8x1xf32> to vector<1x8x8xf32>
    %59 = arith.subf %55, %58 : vector<1x8x8xf32>
    %60 = math.exp %59 : vector<1x8x8xf32>
    %cst_32 = arith.constant dense<0.000000e+00> : vector<1x8xf32>
    %61 = vector.multi_reduction <add>, %60, %cst_32 [2] : vector<1x8x8xf32> to vector<1x8xf32>
    %62 = vector.shape_cast %61 : vector<1x8xf32> to vector<1x8x1xf32>
    %63 = tpu.reciprocal %62 : vector<1x8x1xf32> -> vector<1x8x1xf32>
    %64 = vector.broadcast %63 : vector<1x8x1xf32> to vector<1x8x8xf32>
    %65 = arith.mulf %60, %64 : vector<1x8x8xf32>
    %66 = arith.truncf %65 : vector<1x8x8xf32> to vector<1x8x8xbf16>
    "tpu.trace_start"() <{level = 10 : i32, message = "bqk,bkd->bqd"}> : () -> ()
    %cst_33 = arith.constant dense<0.000000e+00> : vector<1x8x8xf32>
    %67 = tpu.matmul %66, %54, %cst_33 {dimension_numbers = #tpu.dot_dimension_numbers<[2], [1], [1], [2], [0, 0, 0, 1, 1, 2], [0], [0]>} : vector<1x8x8xbf16>, vector<1x8x8xbf16>, vector<1x8x8xf32> -> vector<1x8x8xf32>
    "tpu.trace_stop"() : () -> ()
    %c0_34 = arith.constant 0 : index
    %c0_35 = arith.constant 0 : index
    %c8 = arith.constant 8 : index
    %68 = vector.load %arg13[%c0_34, %c0_35, %c8] : memref<1x8x32xf32, #tpu.memory_space<vmem>>, vector<1x8x8xf32>
    tpu.vector_store %arg13[%c0_34, %c0_35, %c8], %67 {strides = array<i32>} : memref<1x8x32xf32, #tpu.memory_space<vmem>>, vector<1x8x8xf32>,
    %69 = vector.extract_strided_slice %26 {offsets = [0, 0, 16], sizes = [1, 8, 8], strides = [1, 1, 1]} : vector<1x8x32xf32> to vector<1x8x8xf32>
    %70 = arith.truncf %69 : vector<1x8x8xf32> to vector<1x8x8xbf16>
    %71 = vector.extract_strided_slice %27 {offsets = [0, 0, 16], sizes = [1, 8, 8], strides = [1, 1, 1]} : vector<1x8x32xf32> to vector<1x8x8xf32>
    %72 = arith.truncf %71 : vector<1x8x8xf32> to vector<1x8x8xbf16>
    %73 = vector.extract_strided_slice %28 {offsets = [0, 0, 16], sizes = [1, 8, 8], strides = [1, 1, 1]} : vector<1x8x32xf32> to vector<1x8x8xf32>
    %74 = arith.truncf %73 : vector<1x8x8xf32> to vector<1x8x8xbf16>
    "tpu.trace_start"() <{level = 10 : i32, message = "bqd,bkd->bqk"}> : () -> ()
    %cst_36 = arith.constant dense<0.000000e+00> : vector<1x8x8xf32>
    %75 = tpu.matmul %70, %72, %cst_36 {dimension_numbers = #tpu.dot_dimension_numbers<[2], [2], [1], [1], [0, 0, 0, 1, 1, 1], [0], [0]>} : vector<1x8x8xbf16>, vector<1x8x8xbf16>, vector<1x8x8xf32> -> vector<1x8x8xf32>
    "tpu.trace_stop"() : () -> ()
    %cst_37 = arith.constant dense<0xFF800000> : vector<1x8xf32>
    %76 = vector.multi_reduction <maximumf>, %75, %cst_37 [2] : vector<1x8x8xf32> to vector<1x8xf32>
    %77 = vector.shape_cast %76 : vector<1x8xf32> to vector<1x8x1xf32>
    %78 = vector.broadcast %77 : vector<1x8x1xf32> to vector<1x8x8xf32>
    %79 = arith.subf %75, %78 : vector<1x8x8xf32>
    %80 = math.exp %79 : vector<1x8x8xf32>
    %cst_38 = arith.constant dense<0.000000e+00> : vector<1x8xf32>
    %81 = vector.multi_reduction <add>, %80, %cst_38 [2] : vector<1x8x8xf32> to vector<1x8xf32>
    %82 = vector.shape_cast %81 : vector<1x8xf32> to vector<1x8x1xf32>
    %83 = tpu.reciprocal %82 : vector<1x8x1xf32> -> vector<1x8x1xf32>
    %84 = vector.broadcast %83 : vector<1x8x1xf32> to vector<1x8x8xf32>
    %85 = arith.mulf %80, %84 : vector<1x8x8xf32>
    %86 = arith.truncf %85 : vector<1x8x8xf32> to vector<1x8x8xbf16>
    "tpu.trace_start"() <{level = 10 : i32, message = "bqk,bkd->bqd"}> : () -> ()
    %cst_39 = arith.constant dense<0.000000e+00> : vector<1x8x8xf32>
    %87 = tpu.matmul %86, %74, %cst_39 {dimension_numbers = #tpu.dot_dimension_numbers<[2], [1], [1], [2], [0, 0, 0, 1, 1, 2], [0], [0]>} : vector<1x8x8xbf16>, vector<1x8x8xbf16>, vector<1x8x8xf32> -> vector<1x8x8xf32>
    "tpu.trace_stop"() : () -> ()
    %c0_40 = arith.constant 0 : index
    %c0_41 = arith.constant 0 : index
    %c16 = arith.constant 16 : index
    %88 = vector.load %arg13[%c0_40, %c0_41, %c16] : memref<1x8x32xf32, #tpu.memory_space<vmem>>, vector<1x8x8xf32>
    tpu.vector_store %arg13[%c0_40, %c0_41, %c16], %87 {strides = array<i32>} : memref<1x8x32xf32, #tpu.memory_space<vmem>>, vector<1x8x8xf32>,
    %89 = vector.extract_strided_slice %26 {offsets = [0, 0, 24], sizes = [1, 8, 8], strides = [1, 1, 1]} : vector<1x8x32xf32> to vector<1x8x8xf32>
    %90 = arith.truncf %89 : vector<1x8x8xf32> to vector<1x8x8xbf16>
    %91 = vector.extract_strided_slice %27 {offsets = [0, 0, 24], sizes = [1, 8, 8], strides = [1, 1, 1]} : vector<1x8x32xf32> to vector<1x8x8xf32>
    %92 = arith.truncf %91 : vector<1x8x8xf32> to vector<1x8x8xbf16>
    %93 = vector.extract_strided_slice %28 {offsets = [0, 0, 24], sizes = [1, 8, 8], strides = [1, 1, 1]} : vector<1x8x32xf32> to vector<1x8x8xf32>
    %94 = arith.truncf %93 : vector<1x8x8xf32> to vector<1x8x8xbf16>
    "tpu.trace_start"() <{level = 10 : i32, message = "bqd,bkd->bqk"}> : () -> ()
    %cst_42 = arith.constant dense<0.000000e+00> : vector<1x8x8xf32>
    %95 = tpu.matmul %90, %92, %cst_42 {dimension_numbers = #tpu.dot_dimension_numbers<[2], [2], [1], [1], [0, 0, 0, 1, 1, 1], [0], [0]>} : vector<1x8x8xbf16>, vector<1x8x8xbf16>, vector<1x8x8xf32> -> vector<1x8x8xf32>
    "tpu.trace_stop"() : () -> ()
    %cst_43 = arith.constant dense<0xFF800000> : vector<1x8xf32>
    %96 = vector.multi_reduction <maximumf>, %95, %cst_43 [2] : vector<1x8x8xf32> to vector<1x8xf32>
    %97 = vector.shape_cast %96 : vector<1x8xf32> to vector<1x8x1xf32>
    %98 = vector.broadcast %97 : vector<1x8x1xf32> to vector<1x8x8xf32>
    %99 = arith.subf %95, %98 : vector<1x8x8xf32>
    %100 = math.exp %99 : vector<1x8x8xf32>
    %cst_44 = arith.constant dense<0.000000e+00> : vector<1x8xf32>
    %101 = vector.multi_reduction <add>, %100, %cst_44 [2] : vector<1x8x8xf32> to vector<1x8xf32>
    %102 = vector.shape_cast %101 : vector<1x8xf32> to vector<1x8x1xf32>
    %103 = tpu.reciprocal %102 : vector<1x8x1xf32> -> vector<1x8x1xf32>
    %104 = vector.broadcast %103 : vector<1x8x1xf32> to vector<1x8x8xf32>
    %105 = arith.mulf %100, %104 : vector<1x8x8xf32>
    %106 = arith.truncf %105 : vector<1x8x8xf32> to vector<1x8x8xbf16>
    "tpu.trace_start"() <{level = 10 : i32, message = "bqk,bkd->bqd"}> : () -> ()
    %cst_45 = arith.constant dense<0.000000e+00> : vector<1x8x8xf32>
    %107 = tpu.matmul %106, %94, %cst_45 {dimension_numbers = #tpu.dot_dimension_numbers<[2], [1], [1], [2], [0, 0, 0, 1, 1, 2], [0], [0]>} : vector<1x8x8xbf16>, vector<1x8x8xbf16>, vector<1x8x8xf32> -> vector<1x8x8xf32>
    "tpu.trace_stop"() : () -> ()
    %c0_46 = arith.constant 0 : index
    %c0_47 = arith.constant 0 : index
    %c24 = arith.constant 24 : index
    %108 = vector.load %arg13[%c0_46, %c0_47, %c24] : memref<1x8x32xf32, #tpu.memory_space<vmem>>, vector<1x8x8xf32>
    tpu.vector_store %arg13[%c0_46, %c0_47, %c24], %107 {strides = array<i32>} : memref<1x8x32xf32, #tpu.memory_space<vmem>>, vector<1x8x8xf32>,
    %c0_48 = arith.constant 0 : index
    %c0_49 = arith.constant 0 : index
    %c0_50 = arith.constant 0 : index
    %109 = vector.load %arg13[%c0_48, %c0_49, %c0_50] : memref<1x8x32xf32, #tpu.memory_space<vmem>>, vector<1x8x32xf32>
    %110 = vector.shape_cast %109 : vector<1x8x32xf32> to vector<8x32xf32>
    %111 = arith.truncf %110 : vector<8x32xf32> to vector<8x32xbf16>
    %c0_51 = arith.constant 0 : index
    %c0_52 = arith.constant 0 : index
    %112 = vector.load %arg7[%c0_51, %c0_52] : memref<32x32xbf16, #tpu.memory_space<vmem>>, vector<32x32xbf16>
    %cst_53 = arith.constant dense<0.000000e+00> : vector<8x32xf32>
    %113 = tpu.matmul %111, %112, %cst_53 {dimension_numbers = #tpu.dot_dimension_numbers<[1], [0], [0], [1], [0, 0, 1, 1], [], []>} : vector<8x32xbf16>, vector<32x32xbf16>, vector<8x32xf32> -> vector<8x32xf32>
    %c0_54 = arith.constant 0 : index
    %c0_55 = arith.constant 0 : index
    %114 = vector.load %arg11[%c0_54, %c0_55] : memref<1x32xf32, #tpu.memory_space<vmem>>, vector<1x32xf32>
    %115 = vector.broadcast %114 : vector<1x32xf32> to vector<8x32xf32>
    %116 = arith.addf %113, %115 : vector<8x32xf32>
    %117 = vector.shape_cast %116 : vector<8x32xf32> to vector<1x8x32xf32>
    %c0_56 = arith.constant 0 : index
    %c0_57 = arith.constant 0 : index
    %c0_58 = arith.constant 0 : index
    %118 = vector.load %arg12[%c0_56, %c0_57, %c0_58] : memref<1x8x32xf32, #tpu.memory_space<vmem>>, vector<1x8x32xf32>
    tpu.vector_store %arg12[%c0_56, %c0_57, %c0_58], %117 {strides = array<i32>} : memref<1x8x32xf32, #tpu.memory_space<vmem>>, vector<1x8x32xf32>,
    return
  }
  func.func @transform_0(%arg0: i32) -> (i32, i32, i32) {
    %c0_i32 = arith.constant 0 : i32
    %c0_i32_0 = arith.constant 0 : i32
    %c0_i32_1 = arith.constant 0 : i32
    return %arg0, %c0_i32, %c0_i32_0 : i32, i32, i32
  }
  func.func @transform_1(%arg0: i32) -> (i32, i32, i32) {
    %c0_i32 = arith.constant 0 : i32
    %c0_i32_0 = arith.constant 0 : i32
    %c0_i32_1 = arith.constant 0 : i32
    return %arg0, %c0_i32, %c0_i32_0 : i32, i32, i32
  }
  func.func @transform_2(%arg0: i32) -> (i32, i32, i32) {
    %c0_i32 = arith.constant 0 : i32
    %c0_i32_0 = arith.constant 0 : i32
    %c0_i32_1 = arith.constant 0 : i32
    return %arg0, %c0_i32, %c0_i32_0 : i32, i32, i32
  }
  func.func @transform_3(%arg0: i32) -> (i32, i32) {
    %c0_i32 = arith.constant 0 : i32
    %c0_i32_0 = arith.constant 0 : i32
    %c0_i32_1 = arith.constant 0 : i32
    return %c0_i32, %c0_i32_0 : i32, i32
  }
  func.func @transform_4(%arg0: i32) -> (i32, i32) {
    %c0_i32 = arith.constant 0 : i32
    %c0_i32_0 = arith.constant 0 : i32
    %c0_i32_1 = arith.constant 0 : i32
    return %c0_i32, %c0_i32_0 : i32, i32
  }
  func.func @transform_5(%arg0: i32) -> (i32, i32) {
    %c0_i32 = arith.constant 0 : i32
    %c0_i32_0 = arith.constant 0 : i32
    %c0_i32_1 = arith.constant 0 : i32
    return %c0_i32, %c0_i32_0 : i32, i32
  }
  func.func @transform_6(%arg0: i32) -> (i32, i32) {
    %c0_i32 = arith.constant 0 : i32
    %c0_i32_0 = arith.constant 0 : i32
    %c0_i32_1 = arith.constant 0 : i32
    return %c0_i32, %c0_i32_0 : i32, i32
  }
  func.func @transform_7(%arg0: i32) -> (i32, i32) {
    %c0_i32 = arith.constant 0 : i32
    %c0_i32_0 = arith.constant 0 : i32
    %c0_i32_1 = arith.constant 0 : i32
    return %c0_i32, %c0_i32_0 : i32, i32
  }
  func.func @transform_8(%arg0: i32) -> (i32, i32) {
    %c0_i32 = arith.constant 0 : i32
    %c0_i32_0 = arith.constant 0 : i32
    %c0_i32_1 = arith.constant 0 : i32
    return %c0_i32, %c0_i32_0 : i32, i32
  }
  func.func @transform_9(%arg0: i32) -> (i32, i32) {
    %c0_i32 = arith.constant 0 : i32
    %c0_i32_0 = arith.constant 0 : i32
    %c0_i32_1 = arith.constant 0 : i32
    return %c0_i32, %c0_i32_0 : i32, i32
  }
  func.func @transform_10(%arg0: i32) -> (i32, i32) {
    %c0_i32 = arith.constant 0 : i32
    %c0_i32_0 = arith.constant 0 : i32
    %c0_i32_1 = arith.constant 0 : i32
    return %c0_i32, %c0_i32_0 : i32, i32
  }
  func.func @transform_11(%arg0: i32) -> (i32, i32, i32) {
    %c0_i32 = arith.constant 0 : i32
    %c0_i32_0 = arith.constant 0 : i32
    %c0_i32_1 = arith.constant 0 : i32
    return %arg0, %c0_i32, %c0_i32_0 : i32, i32, i32
  }
}

</mosaic_0001>

<llo_original>
// kernel: tpu_custom_call.1
$region0: #{tpu_custom_call.1}
  #allocation0 [shape = 'u32[]', space=smem, size = 0x4, offset = 0x4, fixed_abs, tag = 'smem constant byte address 0x4 - core index']
  #allocation1 [shape = 'u32[144,128]{1,0:T(1,128)}', space=vmem, size = 0x12000, scoped, tag = 'internal scratch']
  #allocation2 [shape = 'f32[1,8,32]{2,1,0:T(8,128)}', space=vmem, size = 0x1000, scoped, tag = 'scratch operand']
  %s0 = inlined_call_operand.hbm [shape: f32[2,8,32], index: 0, kind: input, shape index: {}]
  %s1 = inlined_call_operand.hbm [shape: f32[2,8,32], index: 1, kind: input, shape index: {}]
  %s2 = inlined_call_operand.hbm [shape: f32[2,8,32], index: 2, kind: input, shape index: {}]
  %s3 = inlined_call_operand.hbm [shape: bf16[32,32], index: 3, kind: input, shape index: {}]
  %s4 = inlined_call_operand.hbm [shape: bf16[32,32], index: 4, kind: input, shape index: {}]
  %s5 = inlined_call_operand.vmem [shape: bf16[32,32], index: 5, kind: input, shape index: {}]
  %s6 = inlined_call_operand.hbm [shape: bf16[32,32], index: 6, kind: input, shape index: {}]
  %s7 = inlined_call_operand.vmem [shape: f32[1,32], index: 7, kind: input, shape index: {}]
  %s8 = inlined_call_operand.vmem [shape: f32[1,32], index: 8, kind: input, shape index: {}]
  %s9 = inlined_call_operand.vmem [shape: f32[1,32], index: 9, kind: input, shape index: {}]
  %s10 = inlined_call_operand.vmem [shape: f32[1,32], index: 10, kind: input, shape index: {}]
  %s11 = inlined_call_operand.hbm [shape: f32[2,8,32], index: 11, kind: output, shape index: {}]
  %s12 = sld [smem:[#allocation0]]
  $region101: #{tpu_custom_call.1} parent=0
    _
  %s14 = ssub.s32 1, %s12
  %s15 = scalar_select 0, %s14, %s12
  $region1: #{tpu_custom_call.1} parent=0
    #allocation3 [shape = 'u8[8192]{0}', space=vmem, size = 0x2000, scoped, tag = 'input window, operand 0']
    #allocation4 [shape = 's32[2]{0}', space=sflag, size = 0x8, scoped, tag = 'scoped memory for tpu_custom_call.1']
    #allocation5 [shape = 's32[2]{0}', space=sflag, size = 0x8, scoped, tag = 'scoped memory for tpu_custom_call.1']
    #allocation6 [shape = 'u8[8192]{0}', space=vmem, size = 0x2000, scoped, tag = 'input window, operand 1']
    #allocation7 [shape = 's32[2]{0}', space=sflag, size = 0x8, scoped, tag = 'scoped memory for tpu_custom_call.1']
    #allocation8 [shape = 'u8[8192]{0}', space=vmem, size = 0x2000, scoped, tag = 'input window, operand 2']
    #allocation9 [shape = 'u8[8192]{0}', space=vmem, size = 0x2000, scoped, tag = 'input window, operand 3, single buffered']
    #allocation10 [shape = 's32[1]{0}', space=sflag, size = 0x4, scoped, tag = 'scoped memory for tpu_custom_call.1']
    #allocation11 [shape = 'u8[8192]{0}', space=vmem, size = 0x2000, scoped, tag = 'input window, operand 4, single buffered']
    #allocation12 [shape = 'u8[8192]{0}', space=vmem, size = 0x2000, scoped, tag = 'input window, operand 6, single buffered']
    #allocation13 [shape = 's32[1]{0}', space=sflag, size = 0x4, scoped, tag = 'scoped memory for tpu_custom_call.1']
    #allocation14 [shape = 'u8[8192]{0}', space=vmem, size = 0x2000, scoped, tag = 'output window, operand 0']
    %16 = vsyncpa [#allocation4], 0
    %s17 = scalar_lea.sflag [#allocation4], 1
    %18 = vsyncpa %s17, 0
    %19 = vsyncpa [#allocation7], 0
    %s20 = scalar_lea.sflag [#allocation7], 1
    %21 = vsyncpa %s20, 0
    %22 = vsyncpa [#allocation10], 0
    %23 = vsyncpa [#allocation13], 0
    %24 = vsyncpa [#allocation5], 0
    %s25 = scalar_lea.sflag [#allocation5], 1
    %26 = vsyncpa %s25, 0
    loop: start=0, step=1, limit=4
    $region2: #{tpu_custom_call.1} parent=1 // loop_pre_header
      _
    $region3: #{tpu_custom_call.1} parent=1 // loop_header
      %s28 = sphi 0, %s32
      %p29 = scmp.ge.s32.totalorder %s28, 4
      %s38 = sphi 0, %s40
      %s41 = sphi 0, %s38
      %s42 = sphi 0, %s41
      %s58 = sphi 0, %s42
      %s64 = sphi 0, %s66
      %s67 = sphi 0, %s64
      %s68 = sphi 0, %s67
      %s84 = sphi 0, %s68
      %s90 = sphi 0, %s92
      %s93 = sphi 0, %s90
      %s94 = sphi 0, %s93
      %s110 = sphi 0, %s94
      %s114 = sphi 0, %s114
      %s116 = sphi 0, %s114
      %s117 = sphi 0, %s116
      %s131 = sphi 0, %s117
      %s135 = sphi 0, %s135
      %s137 = sphi 0, %s135
      %s138 = sphi 0, %s137
      %s152 = sphi 0, %s138
      %s156 = sphi 0, %s156
      %s158 = sphi 0, %s156
      %s159 = sphi 0, %s158
      %s173 = sphi 0, %s159
      %s177 = sphi 0, %s177
      %s179 = sphi 0, %s177
      %s180 = sphi 0, %s179
      %s194 = sphi 0, %s180
      %s198 = sphi 0, %s198
      %s200 = sphi 0, %s198
      %s201 = sphi 0, %s200
      %s215 = sphi 0, %s201
      %s219 = sphi 0, %s219
      %s221 = sphi 0, %s219
      %s222 = sphi 0, %s221
      %s236 = sphi 0, %s222
      %s240 = sphi 0, %s240
      %s242 = sphi 0, %s240
      %s243 = sphi 0, %s242
      %s257 = sphi 0, %s243
      %s261 = sphi 0, %s261
      %s263 = sphi 0, %s261
      %s264 = sphi 0, %s263
      %s278 = sphi 0, %s264
      %s284 = sphi 0, %s286
      %s287 = sphi 0, %s284
      %s288 = sphi 0, %s287
      %s304 = sphi 0, %s288
    $region4: #{tpu_custom_call.1} parent=1 // loop_header_branch
      %31 = sbr.rel (%p29) target = $region8
    $region5: #{tpu_custom_call.1} parent=1 // loop_body
      %s33 = ssub.s32 %s28, 1
      %s34 = ssub.s32 %s28, 2
      %s35 = sadd.s32 %s28, 1
      %s36 = ssub.s32 %s28, %s35
      %p37 = scmp.eq.s32.totalorder %s36, 0
      %s39 = sadd.s32 %s38, 1
      %s40 = scalar_select %p37, %s38, %s39
      %p43 = pneg %p37
      %p44 = scmp.eq.s32.totalorder %s28, 1
      %p45 = por %p43, %p44
      %p46 = scmp.ne.s32.totalorder %s38, %s41
      %p47 = scmp.eq.s32.totalorder %s28, 0
      %p48 = por %p46, %p47
      %p49 = scmp.ne.s32.totalorder %s38, %s41
      %p50 = scmp.eq.s32.totalorder %s33, 1
      %p51 = por %p49, %p50
      %p52 = scmp.ne.s32.totalorder %s41, %s42
      %p53 = scmp.eq.s32.totalorder %s33, 0
      %p54 = por %p52, %p53
      %p55 = scmp.ne.s32.totalorder %s41, %s42
      %p56 = scmp.eq.s32.totalorder %s34, 1
      %p57 = por %p55, %p56
      %p59 = scmp.ne.s32.totalorder %s42, %s58
      %p60 = scmp.eq.s32.totalorder %s34, 0
      %p61 = por %p59, %p60
      %s62 = ssub.s32 %s28, %s35
      %p63 = scmp.eq.s32.totalorder %s62, 0
      %s65 = sadd.s32 %s64, 1
      %s66 = scalar_select %p63, %s64, %s65
      %p69 = pneg %p63
      %p70 = scmp.eq.s32.totalorder %s28, 1
      %p71 = por %p69, %p70
      %p72 = scmp.ne.s32.totalorder %s64, %s67
      %p73 = scmp.eq.s32.totalorder %s28, 0
      %p74 = por %p72, %p73
      %p75 = scmp.ne.s32.totalorder %s64, %s67
      %p76 = scmp.eq.s32.totalorder %s33, 1
      %p77 = por %p75, %p76
      %p78 = scmp.ne.s32.totalorder %s67, %s68
      %p79 = scmp.eq.s32.totalorder %s33, 0
      %p80 = por %p78, %p79
      %p81 = scmp.ne.s32.totalorder %s67, %s68
      %p82 = scmp.eq.s32.totalorder %s34, 1
      %p83 = por %p81, %p82
      %p85 = scmp.ne.s32.totalorder %s68, %s84
      %p86 = scmp.eq.s32.totalorder %s34, 0
      %p87 = por %p85, %p86
      %s88 = ssub.s32 %s28, %s35
      %p89 = scmp.eq.s32.totalorder %s88, 0
      %s91 = sadd.s32 %s90, 1
      %s92 = scalar_select %p89, %s90, %s91
      %p95 = pneg %p89
      %p96 = scmp.eq.s32.totalorder %s28, 1
      %p97 = por %p95, %p96
      %p98 = scmp.ne.s32.totalorder %s90, %s93
      %p99 = scmp.eq.s32.totalorder %s28, 0
      %p100 = por %p98, %p99
      %p101 = scmp.ne.s32.totalorder %s90, %s93
      %p102 = scmp.eq.s32.totalorder %s33, 1
      %p103 = por %p101, %p102
      %p104 = scmp.ne.s32.totalorder %s93, %s94
      %p105 = scmp.eq.s32.totalorder %s33, 0
      %p106 = por %p104, %p105
      %p107 = scmp.ne.s32.totalorder %s93, %s94
      %p108 = scmp.eq.s32.totalorder %s34, 1
      %p109 = por %p107, %p108
      %p111 = scmp.ne.s32.totalorder %s94, %s110
      %p112 = scmp.eq.s32.totalorder %s34, 0
      %p113 = por %p111, %p112
      %s115 = sadd.s32 %s114, 1
      %p118 = scmp.eq.s32.totalorder %s28, 1
      %p119 = scmp.ne.s32.totalorder %s114, %s116
      %p120 = scmp.eq.s32.totalorder %s28, 0
      %p121 = por %p119, %p120
      %p122 = scmp.ne.s32.totalorder %s114, %s116
      %p123 = scmp.eq.s32.totalorder %s33, 1
      %p124 = por %p122, %p123
      %p125 = scmp.ne.s32.totalorder %s116, %s117
      %p126 = scmp.eq.s32.totalorder %s33, 0
      %p127 = por %p125, %p126
      %p128 = scmp.ne.s32.totalorder %s116, %s117
      %p129 = scmp.eq.s32.totalorder %s34, 1
      %p130 = por %p128, %p129
      %p132 = scmp.ne.s32.totalorder %s117, %s131
      %p133 = scmp.eq.s32.totalorder %s34, 0
      %p134 = por %p132, %p133
      %s136 = sadd.s32 %s135, 1
      %p139 = scmp.eq.s32.totalorder %s28, 1
      %p140 = scmp.ne.s32.totalorder %s135, %s137
      %p141 = scmp.eq.s32.totalorder %s28, 0
      %p142 = por %p140, %p141
      %p143 = scmp.ne.s32.totalorder %s135, %s137
      %p144 = scmp.eq.s32.totalorder %s33, 1
      %p145 = por %p143, %p144
      %p146 = scmp.ne.s32.totalorder %s137, %s138
      %p147 = scmp.eq.s32.totalorder %s33, 0
      %p148 = por %p146, %p147
      %p149 = scmp.ne.s32.totalorder %s137, %s138
      %p150 = scmp.eq.s32.totalorder %s34, 1
      %p151 = por %p149, %p150
      %p153 = scmp.ne.s32.totalorder %s138, %s152
      %p154 = scmp.eq.s32.totalorder %s34, 0
      %p155 = por %p153, %p154
      %s157 = sadd.s32 %s156, 1
      %p160 = scmp.eq.s32.totalorder %s28, 1
      %p161 = scmp.ne.s32.totalorder %s156, %s158
      %p162 = scmp.eq.s32.totalorder %s28, 0
      %p163 = por %p161, %p162
      %p164 = scmp.ne.s32.totalorder %s156, %s158
      %p165 = scmp.eq.s32.totalorder %s33, 1
      %p166 = por %p164, %p165
      %p167 = scmp.ne.s32.totalorder %s158, %s159
      %p168 = scmp.eq.s32.totalorder %s33, 0
      %p169 = por %p167, %p168
      %p170 = scmp.ne.s32.totalorder %s158, %s159
      %p171 = scmp.eq.s32.totalorder %s34, 1
      %p172 = por %p170, %p171
      %p174 = scmp.ne.s32.totalorder %s159, %s173
      %p175 = scmp.eq.s32.totalorder %s34, 0
      %p176 = por %p174, %p175
      %s178 = sadd.s32 %s177, 1
      %p181 = scmp.eq.s32.totalorder %s28, 1
      %p182 = scmp.ne.s32.totalorder %s177, %s179
      %p183 = scmp.eq.s32.totalorder %s28, 0
      %p184 = por %p182, %p183
      %p185 = scmp.ne.s32.totalorder %s177, %s179
      %p186 = scmp.eq.s32.totalorder %s33, 1
      %p187 = por %p185, %p186
      %p188 = scmp.ne.s32.totalorder %s179, %s180
      %p189 = scmp.eq.s32.totalorder %s33, 0
      %p190 = por %p188, %p189
      %p191 = scmp.ne.s32.totalorder %s179, %s180
      %p192 = scmp.eq.s32.totalorder %s34, 1
      %p193 = por %p191, %p192
      %p195 = scmp.ne.s32.totalorder %s180, %s194
      %p196 = scmp.eq.s32.totalorder %s34, 0
      %p197 = por %p195, %p196
      %s199 = sadd.s32 %s198, 1
      %p202 = scmp.eq.s32.totalorder %s28, 1
      %p203 = scmp.ne.s32.totalorder %s198, %s200
      %p204 = scmp.eq.s32.totalorder %s28, 0
      %p205 = por %p203, %p204
      %p206 = scmp.ne.s32.totalorder %s198, %s200
      %p207 = scmp.eq.s32.totalorder %s33, 1
      %p208 = por %p206, %p207
      %p209 = scmp.ne.s32.totalorder %s200, %s201
      %p210 = scmp.eq.s32.totalorder %s33, 0
      %p211 = por %p209, %p210
      %p212 = scmp.ne.s32.totalorder %s200, %s201
      %p213 = scmp.eq.s32.totalorder %s34, 1
      %p214 = por %p212, %p213
      %p216 = scmp.ne.s32.totalorder %s201, %s215
      %p217 = scmp.eq.s32.totalorder %s34, 0
      %p218 = por %p216, %p217
      %s220 = sadd.s32 %s219, 1
      %p223 = scmp.eq.s32.totalorder %s28, 1
      %p224 = scmp.ne.s32.totalorder %s219, %s221
      %p225 = scmp.eq.s32.totalorder %s28, 0
      %p226 = por %p224, %p225
      %p227 = scmp.ne.s32.totalorder %s219, %s221
      %p228 = scmp.eq.s32.totalorder %s33, 1
      %p229 = por %p227, %p228
      %p230 = scmp.ne.s32.totalorder %s221, %s222
      %p231 = scmp.eq.s32.totalorder %s33, 0
      %p232 = por %p230, %p231
      %p233 = scmp.ne.s32.totalorder %s221, %s222
      %p234 = scmp.eq.s32.totalorder %s34, 1
      %p235 = por %p233, %p234
      %p237 = scmp.ne.s32.totalorder %s222, %s236
      %p238 = scmp.eq.s32.totalorder %s34, 0
      %p239 = por %p237, %p238
      %s241 = sadd.s32 %s240, 1
      %p244 = scmp.eq.s32.totalorder %s28, 1
      %p245 = scmp.ne.s32.totalorder %s240, %s242
      %p246 = scmp.eq.s32.totalorder %s28, 0
      %p247 = por %p245, %p246
      %p248 = scmp.ne.s32.totalorder %s240, %s242
      %p249 = scmp.eq.s32.totalorder %s33, 1
      %p250 = por %p248, %p249
      %p251 = scmp.ne.s32.totalorder %s242, %s243
      %p252 = scmp.eq.s32.totalorder %s33, 0
      %p253 = por %p251, %p252
      %p254 = scmp.ne.s32.totalorder %s242, %s243
      %p255 = scmp.eq.s32.totalorder %s34, 1
      %p256 = por %p254, %p255
      %p258 = scmp.ne.s32.totalorder %s243, %s257
      %p259 = scmp.eq.s32.totalorder %s34, 0
      %p260 = por %p258, %p259
      %s262 = sadd.s32 %s261, 1
      %p265 = scmp.eq.s32.totalorder %s28, 1
      %p266 = scmp.ne.s32.totalorder %s261, %s263
      %p267 = scmp.eq.s32.totalorder %s28, 0
      %p268 = por %p266, %p267
      %p269 = scmp.ne.s32.totalorder %s261, %s263
      %p270 = scmp.eq.s32.totalorder %s33, 1
      %p271 = por %p269, %p270
      %p272 = scmp.ne.s32.totalorder %s263, %s264
      %p273 = scmp.eq.s32.totalorder %s33, 0
      %p274 = por %p272, %p273
      %p275 = scmp.ne.s32.totalorder %s263, %s264
      %p276 = scmp.eq.s32.totalorder %s34, 1
      %p277 = por %p275, %p276
      %p279 = scmp.ne.s32.totalorder %s264, %s278
      %p280 = scmp.eq.s32.totalorder %s34, 0
      %p281 = por %p279, %p280
      %s282 = ssub.s32 %s28, %s35
      %p283 = scmp.eq.s32.totalorder %s282, 0
      %s285 = sadd.s32 %s284, 1
      %s286 = scalar_select %p283, %s284, %s285
      %p289 = pneg %p283
      %p290 = scmp.eq.s32.totalorder %s28, 1
      %p291 = por %p289, %p290
      %p292 = scmp.ne.s32.totalorder %s284, %s287
      %p293 = scmp.eq.s32.totalorder %s28, 0
      %p294 = por %p292, %p293
      %p295 = scmp.ne.s32.totalorder %s284, %s287
      %p296 = scmp.eq.s32.totalorder %s33, 1
      %p297 = por %p295, %p296
      %p298 = scmp.ne.s32.totalorder %s287, %s288
      %p299 = scmp.eq.s32.totalorder %s33, 0
      %p300 = por %p298, %p299
      %p301 = scmp.ne.s32.totalorder %s287, %s288
      %p302 = scmp.eq.s32.totalorder %s34, 1
      %p303 = por %p301, %p302
      %p305 = scmp.ne.s32.totalorder %s288, %s304
      %p306 = scmp.eq.s32.totalorder %s34, 0
      %p307 = por %p305, %p306
      %p308 = scmp.le.s32.totalorder 1, %s28
      %p309 = scmp.lt.s32.totalorder %s28, 3
      %p310 = pnand %p308, %p309
      %p311 = pneg %p310
      // Predicated region
      $region9: #{tpu_custom_call.1} parent=5 // pred_check
        _
      $region10: #{tpu_custom_call.1} parent=5 // pred_check_branch
        %313 = sbr.rel (%p310) target = $region12
      $region11: #{tpu_custom_call.1} parent=5 // pred_region
        %s314 = ssub.s32 %s28, 1
        // Predicated region
        $region13: #{tpu_custom_call.1} parent=11 // pred_check
          %p315 = pneg %p127
        $region14: #{tpu_custom_call.1} parent=11 // pred_check_branch
          %317 = sbr.rel (%p315) target = $region16
        $region15: #{tpu_custom_call.1} parent=11 // pred_region
          %s319 = ssub.s32 256, 256
          %320 = vsyncadd [#allocation10], %s319
          %s321 = sshll.u32 [#allocation9], 4
          %s322 = int_to_ptr.vmem [resolvable:$true] %s321
          %327 = dma.hbm_to_vmem [thread:$0]  %s3, 256, %s322, [#allocation10], 64, 64, 4
        $region16: #{tpu_custom_call.1} parent=11 // pred_fallthru
          _
        // Predicated region
        $region17: #{tpu_custom_call.1} parent=11 // pred_check
          %p328 = pneg %p148
        $region18: #{tpu_custom_call.1} parent=11 // pred_check_branch
          %330 = sbr.rel (%p328) target = $region20
        $region19: #{tpu_custom_call.1} parent=11 // pred_region
          %s332 = ssub.s32 256, 256
          %333 = vsyncadd [#allocation10], %s332
          %s334 = sshll.u32 [#allocation11], 4
          %s335 = int_to_ptr.vmem [resolvable:$true] %s334
          %340 = dma.hbm_to_vmem [thread:$0]  %s4, 256, %s335, [#allocation10], 64, 64, 4
        $region20: #{tpu_custom_call.1} parent=11 // pred_fallthru
          _
        // Predicated region
        $region21: #{tpu_custom_call.1} parent=11 // pred_check
          %p341 = pneg %p169
        $region22: #{tpu_custom_call.1} parent=11 // pred_check_branch
          %343 = sbr.rel (%p341) target = $region24
        $region23: #{tpu_custom_call.1} parent=11 // pred_region
          _
        $region24: #{tpu_custom_call.1} parent=11 // pred_fallthru
          _
        // Predicated region
        $region25: #{tpu_custom_call.1} parent=11 // pred_check
          %p344 = pneg %p190
        $region26: #{tpu_custom_call.1} parent=11 // pred_check_branch
          %346 = sbr.rel (%p344) target = $region28
        $region27: #{tpu_custom_call.1} parent=11 // pred_region
          %s348 = ssub.s32 256, 256
          %349 = vsyncadd [#allocation13], %s348
          %s350 = sshll.u32 [#allocation12], 4
          %s351 = int_to_ptr.vmem [resolvable:$true] %s350
          %356 = dma.hbm_to_vmem [thread:$0]  %s6, 256, %s351, [#allocation13], 64, 64, 4
        $region28: #{tpu_custom_call.1} parent=11 // pred_fallthru
          _
        // Predicated region
        $region29: #{tpu_custom_call.1} parent=11 // pred_check
          %p357 = pneg %p211
        $region30: #{tpu_custom_call.1} parent=11 // pred_check_branch
          %359 = sbr.rel (%p357) target = $region32
        $region31: #{tpu_custom_call.1} parent=11 // pred_region
          _
        $region32: #{tpu_custom_call.1} parent=11 // pred_fallthru
          _
        // Predicated region
        $region33: #{tpu_custom_call.1} parent=11 // pred_check
          %p360 = pneg %p232
        $region34: #{tpu_custom_call.1} parent=11 // pred_check_branch
          %362 = sbr.rel (%p360) target = $region36
        $region35: #{tpu_custom_call.1} parent=11 // pred_region
          _
        $region36: #{tpu_custom_call.1} parent=11 // pred_fallthru
          _
        // Predicated region
        $region37: #{tpu_custom_call.1} parent=11 // pred_check
          %p363 = pneg %p253
        $region38: #{tpu_custom_call.1} parent=11 // pred_check_branch
          %365 = sbr.rel (%p363) target = $region40
        $region39: #{tpu_custom_call.1} parent=11 // pred_region
          _
        $region40: #{tpu_custom_call.1} parent=11 // pred_fallthru
          _
        // Predicated region
        $region41: #{tpu_custom_call.1} parent=11 // pred_check
          %p366 = pneg %p274
        $region42: #{tpu_custom_call.1} parent=11 // pred_check_branch
          %368 = sbr.rel (%p366) target = $region44
        $region43: #{tpu_custom_call.1} parent=11 // pred_region
          _
        $region44: #{tpu_custom_call.1} parent=11 // pred_fallthru
          _
      $region12: #{tpu_custom_call.1} parent=5 // pred_fallthru
        _
      %p369 = scmp.lt.s32.totalorder %s28, 2
      // Predicated region
      $region45: #{tpu_custom_call.1} parent=5 // pred_check
        %p370 = pneg %p369
      $region46: #{tpu_custom_call.1} parent=5 // pred_check_branch
        %372 = sbr.rel (%p370) target = $region48
      $region47: #{tpu_custom_call.1} parent=5 // pred_region
        // Predicated region
        $region49: #{tpu_custom_call.1} parent=47 // pred_check
          %p373 = pneg %p48
        $region50: #{tpu_custom_call.1} parent=47 // pred_check_branch
          %375 = sbr.rel (%p373) target = $region52
        $region51: #{tpu_custom_call.1} parent=47 // pred_region
          %s376 = sand.u32 %s38, 1
          %s377 = scalar_lea.sflag [#allocation4], %s376
          %s378 = sand.u32 %s38, 1
          %s379 = smul.addr %s378, 8
          %s380 = scalar_lea.vmem [#allocation3], %s379
          %s382 = ssub.s32 128, 128
          %383 = vsyncadd %s377, %s382
          %s384 = smul.addr %s28, 128
          %s385 = scalar_lea.hbm %s0, %s384
          %s387 = sshll.u32 %s380, 4
          %s388 = int_to_ptr.vmem [resolvable:$true] %s387
          %390 = dma.hbm_to_vmem [thread:$0]  %s385, 128, %s388, %s377
        $region52: #{tpu_custom_call.1} parent=47 // pred_fallthru
          _
        // Predicated region
        $region53: #{tpu_custom_call.1} parent=47 // pred_check
          %p391 = pneg %p74
        $region54: #{tpu_custom_call.1} parent=47 // pred_check_branch
          %393 = sbr.rel (%p391) target = $region56
        $region55: #{tpu_custom_call.1} parent=47 // pred_region
          %s394 = sand.u32 %s28, 1
          %s395 = scalar_lea.sflag [#allocation7], %s394
          %s396 = sand.u32 %s64, 1
          %s397 = smul.addr %s396, 8
          %s398 = scalar_lea.vmem [#allocation6], %s397
          %s400 = ssub.s32 128, 128
          %401 = vsyncadd %s395, %s400
          %s402 = smul.addr %s28, 128
          %s403 = scalar_lea.hbm %s1, %s402
          %s405 = sshll.u32 %s398, 4
          %s406 = int_to_ptr.vmem [resolvable:$true] %s405
          %408 = dma.hbm_to_vmem [thread:$0]  %s403, 128, %s406, %s395
        $region56: #{tpu_custom_call.1} parent=47 // pred_fallthru
          _
        // Predicated region
        $region57: #{tpu_custom_call.1} parent=47 // pred_check
          %p409 = pneg %p100
        $region58: #{tpu_custom_call.1} parent=47 // pred_check_branch
          %411 = sbr.rel (%p409) target = $region60
        $region59: #{tpu_custom_call.1} parent=47 // pred_region
          %s412 = sand.u32 %s28, 1
          %s413 = scalar_lea.sflag [#allocation7], %s412
          %s414 = sand.u32 %s90, 1
          %s415 = smul.addr %s414, 8
          %s416 = scalar_lea.vmem [#allocation8], %s415
          %s418 = ssub.s32 128, 128
          %419 = vsyncadd %s413, %s418
          %s420 = smul.addr %s28, 128
          %s421 = scalar_lea.hbm %s2, %s420
          %s423 = sshll.u32 %s416, 4
          %s424 = int_to_ptr.vmem [resolvable:$true] %s423
          %426 = dma.hbm_to_vmem [thread:$0]  %s421, 128, %s424, %s413
        $region60: #{tpu_custom_call.1} parent=47 // pred_fallthru
          _
      $region48: #{tpu_custom_call.1} parent=5 // pred_fallthru
        _
      %p427 = scmp.le.s32.totalorder 1, %s28
      %p428 = scmp.lt.s32.totalorder %s28, 3
      %p429 = pnand %p427, %p428
      %p430 = pneg %p429
      // Predicated region
      $region61: #{tpu_custom_call.1} parent=5 // pred_check
        _
      $region62: #{tpu_custom_call.1} parent=5 // pred_check_branch
        %432 = sbr.rel (%p429) target = $region64
      $region63: #{tpu_custom_call.1} parent=5 // pred_region
        %s433 = ssub.s32 %s28, 1
        %s434 = sand.u32 %s41, 1
        %s435 = scalar_lea.sflag [#allocation4], %s434
        %s436 = sand.u32 %s41, 1
        %s437 = smul.addr %s436, 8
        %s438 = scalar_lea.vmem [#allocation3], %s437
        // Predicated region
        $region65: #{tpu_custom_call.1} parent=63 // pred_check
          %p439 = pneg %p54
        $region66: #{tpu_custom_call.1} parent=63 // pred_check_branch
          %441 = sbr.rel (%p439) target = $region68
        $region67: #{tpu_custom_call.1} parent=63 // pred_region
          %442 = dma.done %s435, 128
        $region68: #{tpu_custom_call.1} parent=63 // pred_fallthru
          _
        %s443 = sand.u32 %s33, 1
        %s444 = scalar_lea.sflag [#allocation7], %s443
        %s445 = sand.u32 %s67, 1
        %s446 = smul.addr %s445, 8
        %s447 = scalar_lea.vmem [#allocation6], %s446
        // Predicated region
        $region69: #{tpu_custom_call.1} parent=63 // pred_check
          %p448 = pneg %p80
        $region70: #{tpu_custom_call.1} parent=63 // pred_check_branch
          %450 = sbr.rel (%p448) target = $region72
        $region71: #{tpu_custom_call.1} parent=63 // pred_region
          %451 = dma.done %s444, 128
        $region72: #{tpu_custom_call.1} parent=63 // pred_fallthru
          _
        %s452 = sand.u32 %s33, 1
        %s453 = scalar_lea.sflag [#allocation7], %s452
        %s454 = sand.u32 %s93, 1
        %s455 = smul.addr %s454, 8
        %s456 = scalar_lea.vmem [#allocation8], %s455
        // Predicated region
        $region73: #{tpu_custom_call.1} parent=63 // pred_check
          %p457 = pneg %p106
        $region74: #{tpu_custom_call.1} parent=63 // pred_check_branch
          %459 = sbr.rel (%p457) target = $region76
        $region75: #{tpu_custom_call.1} parent=63 // pred_region
          %460 = dma.done %s453, 128
        $region76: #{tpu_custom_call.1} parent=63 // pred_fallthru
          _
        // Predicated region
        $region77: #{tpu_custom_call.1} parent=63 // pred_check
          %p461 = pneg %p127
        $region78: #{tpu_custom_call.1} parent=63 // pred_check_branch
          %463 = sbr.rel (%p461) target = $region80
        $region79: #{tpu_custom_call.1} parent=63 // pred_region
          %464 = dma.done [#allocation10], 256
        $region80: #{tpu_custom_call.1} parent=63 // pred_fallthru
          _
        // Predicated region
        $region81: #{tpu_custom_call.1} parent=63 // pred_check
          %p465 = pneg %p148
        $region82: #{tpu_custom_call.1} parent=63 // pred_check_branch
          %467 = sbr.rel (%p465) target = $region84
        $region83: #{tpu_custom_call.1} parent=63 // pred_region
          %468 = dma.done [#allocation10], 256
        $region84: #{tpu_custom_call.1} parent=63 // pred_fallthru
          _
        // Predicated region
        $region85: #{tpu_custom_call.1} parent=63 // pred_check
          %p469 = pneg %p190
        $region86: #{tpu_custom_call.1} parent=63 // pred_check_branch
          %471 = sbr.rel (%p469) target = $region88
        $region87: #{tpu_custom_call.1} parent=63 // pred_region
          %472 = dma.done [#allocation13], 256
        $region88: #{tpu_custom_call.1} parent=63 // pred_fallthru
          _
        %s473 = sand.u32 %s41, 1
        %s474 = scalar_lea.sflag [#allocation4], %s473
        %s475 = sand.u32 %s41, 1
        %s476 = smul.addr %s475, 8
        %s477 = scalar_lea.vmem [#allocation3], %s476
        %p478 = pneg %p54
        %p479 = pneg %p51
        %s480 = sand.u32 %s33, 1
        %s481 = scalar_lea.sflag [#allocation7], %s480
        %s482 = sand.u32 %s67, 1
        %s483 = smul.addr %s482, 8
        %s484 = scalar_lea.vmem [#allocation6], %s483
        %p485 = pneg %p80
        %p486 = pneg %p77
        %s487 = sand.u32 %s33, 1
        %s488 = scalar_lea.sflag [#allocation7], %s487
        %s489 = sand.u32 %s93, 1
        %s490 = smul.addr %s489, 8
        %s491 = scalar_lea.vmem [#allocation8], %s490
        %p492 = pneg %p106
        %p493 = pneg %p103
        %p494 = pneg %p127
        %p495 = pneg %p124
        %p496 = pneg %p148
        %p497 = pneg %p145
        %p498 = pneg %p169
        %p499 = pneg %p166
        %p500 = pneg %p190
        %p501 = pneg %p187
        %p502 = pneg %p211
        %p503 = pneg %p208
        %p504 = pneg %p232
        %p505 = pneg %p229
        %p506 = pneg %p253
        %p507 = pneg %p250
        %p508 = pneg %p274
        %p509 = pneg %p271
        %p510 = pneg %p300
        %p511 = pneg %p297
        %s512 = sand.u32 %s287, 1
        %s513 = scalar_lea.sflag [#allocation5], %s512
        %s514 = sand.u32 %s287, 1
        %s515 = smul.addr %s514, 8
        %s516 = scalar_lea.vmem [#allocation14], %s515
        %v518 = vld [vmem:[%s438] sm:$0xff]
        %v519 = vpack.c.bf16 %v518, %v518
        %v520 = vld [vmem:[%s447] sm:$0xff]
        %v521 = vpack.c.bf16 %v520, %v520
        %v522 = vld [vmem:[%s456] sm:$0xff]
        %v523 = vpack.c.bf16 %v522, %v522
        %v524 = vld [vmem:[#allocation9] sm:$0xf]
        %v525 = vld [vmem:[#allocation9 + $0x4] sm:$0xf]
        %v526 = vld [vmem:[#allocation9 + $0x8] sm:$0xf]
        %v527 = vld [vmem:[#allocation9 + $0xc] sm:$0xf]
        %v528 = vld [vmem:[%s7] sm:$0x1]
        %v530 = vlaneseq
        %v531 = vshrl.u32 %v530, 7
        %v532 = vsub.s32 0, %v531
        %v533 = vrot.slane %v528, %v532
        %v539 = vunpack.c.l.b16 %v524
        %v540 = vunpack.c.l.b16 %v525
        %v541 = vunpack.c.l.b16 %v526
        %v542 = vunpack.c.l.b16 %v527
        %v543 = vpack.c.b16 %v540, %v539
        %v544 = vpack.c.b16 %v542, %v541
        %vm547 = vcmask 261120
        %v549 = vsel %vm547, %v519, 0
        %551 = vmatprep.subr.bf16.mxu0 0
        %552 = vmatpush1.bf16.msra.mxu0 %v543
        %553 = vmatprep.subr.bf16.mxu0 0
        %554 = vmatpush1.bf16.msra.mxu0 %v544
        %555 = vmatprep.subr.bf16.mxu0 0
        %556 = vmatpush1.bf16.msra.mxu0 0
        %557 = vmatprep.subr.bf16.mxu0 0
        %558 = vmatpush1.bf16.msra.mxu0 0
        %559 = vmatprep.subr.bf16.mxu0 0
        %560 = vmatpush1.bf16.msra.mxu0 0
        %561 = vmatprep.subr.bf16.mxu0 0
        %562 = vmatpush1.bf16.msra.mxu0 0
        %563 = vmatprep.subr.bf16.mxu0 0
        %564 = vmatpush1.bf16.msra.mxu0 0
        %565 = vmatprep.subr.bf16.mxu0 0
        %566 = vmatpush1.bf16.msra.mxu0 0
        %567 = vmatprep.subr.bf16.mxu0 0
        %568 = vmatpush1.bf16.msra.mxu0 0
        %569 = vmatprep.subr.bf16.mxu0 0
        %570 = vmatpush1.bf16.msra.mxu0 0
        %571 = vmatprep.subr.bf16.mxu0 0
        %572 = vmatpush1.bf16.msra.mxu0 0
        %573 = vmatprep.subr.bf16.mxu0 0
        %574 = vmatpush1.bf16.msra.mxu0 0
        %575 = vmatprep.subr.bf16.mxu0 0
        %576 = vmatpush1.bf16.msra.mxu0 0
        %577 = vmatprep.subr.bf16.mxu0 0
        %578 = vmatpush1.bf16.msra.mxu0 0
        %579 = vmatprep.subr.bf16.mxu0 0
        %580 = vmatpush1.bf16.msra.mxu0 0
        %581 = vmatprep.subr.bf16.mxu0 0
        %582 = vmatpush1.bf16.msra.mxu0 0
        %583 = vmatprep.mubr.bf16.mxu0 0
        %584 = vmatmul.mubr.bf16.gmra.mrb[0].mxu0 %v549
        %v585 = vpop.f32.mrb[0].mxu0
        %v586 = vadd.f32 %v533, %v585
        %v587 = vpop.f32.mrb[0].mxu0
        %v588 = vpop.f32.mrb[0].mxu0
        %v589 = vpop.f32.mrb[0].mxu0
        %590 = vdwg.mxu0
        %v591 = vmul.f32 %v586, 0.35355338
        %v592 = vld [vmem:[#allocation11] sm:$0xf]
        %v593 = vld [vmem:[#allocation11 + $0x4] sm:$0xf]
        %v594 = vld [vmem:[#allocation11 + $0x8] sm:$0xf]
        %v595 = vld [vmem:[#allocation11 + $0xc] sm:$0xf]
        %v596 = vld [vmem:[%s8] sm:$0x1]
        %v598 = vlaneseq
        %v599 = vshrl.u32 %v598, 7
        %v600 = vsub.s32 0, %v599
        %v601 = vrot.slane %v596, %v600
        %v607 = vunpack.c.l.b16 %v592
        %v608 = vunpack.c.l.b16 %v593
        %v609 = vunpack.c.l.b16 %v594
        %v610 = vunpack.c.l.b16 %v595
        %v611 = vpack.c.b16 %v608, %v607
        %v612 = vpack.c.b16 %v610, %v609
        %v616 = vsel %vm547, %v521, 0
        %618 = vmatprep.subr.bf16.mxu0 0
        %619 = vmatpush1.bf16.msra.mxu0 %v611
        %620 = vmatprep.subr.bf16.mxu0 0
        %621 = vmatpush1.bf16.msra.mxu0 %v612
        %622 = vmatprep.subr.bf16.mxu0 0
        %623 = vmatpush1.bf16.msra.mxu0 0
        %624 = vmatprep.subr.bf16.mxu0 0
        %625 = vmatpush1.bf16.msra.mxu0 0
        %626 = vmatprep.subr.bf16.mxu0 0
        %627 = vmatpush1.bf16.msra.mxu0 0
        %628 = vmatprep.subr.bf16.mxu0 0
        %629 = vmatpush1.bf16.msra.mxu0 0
        %630 = vmatprep.subr.bf16.mxu0 0
        %631 = vmatpush1.bf16.msra.mxu0 0
        %632 = vmatprep.subr.bf16.mxu0 0
        %633 = vmatpush1.bf16.msra.mxu0 0
        %634 = vmatprep.subr.bf16.mxu0 0
        %635 = vmatpush1.bf16.msra.mxu0 0
        %636 = vmatprep.subr.bf16.mxu0 0
        %637 = vmatpush1.bf16.msra.mxu0 0
        %638 = vmatprep.subr.bf16.mxu0 0
        %639 = vmatpush1.bf16.msra.mxu0 0
        %640 = vmatprep.subr.bf16.mxu0 0
        %641 = vmatpush1.bf16.msra.mxu0 0
        %642 = vmatprep.subr.bf16.mxu0 0
        %643 = vmatpush1.bf16.msra.mxu0 0
        %644 = vmatprep.subr.bf16.mxu0 0
        %645 = vmatpush1.bf16.msra.mxu0 0
        %646 = vmatprep.subr.bf16.mxu0 0
        %647 = vmatpush1.bf16.msra.mxu0 0
        %648 = vmatprep.subr.bf16.mxu0 0
        %649 = vmatpush1.bf16.msra.mxu0 0
        %650 = vmatprep.mubr.bf16.mxu0 0
        %651 = vmatmul.mubr.bf16.gmra.mrb[0].mxu0 %v616
        %v652 = vpop.f32.mrb[0].mxu0
        %v653 = vadd.f32 %v601, %v652
        %v654 = vpop.f32.mrb[0].mxu0
        %v655 = vpop.f32.mrb[0].mxu0
        %v656 = vpop.f32.mrb[0].mxu0
        %657 = vdwg.mxu0
        %v658 = vld [vmem:[%s5] sm:$0xf]
        %v659 = vld [vmem:[%s5 + $0x4] sm:$0xf]
        %v660 = vld [vmem:[%s5 + $0x8] sm:$0xf]
        %v661 = vld [vmem:[%s5 + $0xc] sm:$0xf]
        %v662 = vld [vmem:[%s9] sm:$0x1]
        %v664 = vlaneseq
        %v665 = vshrl.u32 %v664, 7
        %v666 = vsub.s32 0, %v665
        %v667 = vrot.slane %v662, %v666
        %v673 = vunpack.c.l.b16 %v658
        %v674 = vunpack.c.l.b16 %v659
        %v675 = vunpack.c.l.b16 %v660
        %v676 = vunpack.c.l.b16 %v661
        %v677 = vpack.c.b16 %v674, %v673
        %v678 = vpack.c.b16 %v676, %v675
        %v682 = vsel %vm547, %v523, 0
        %684 = vmatprep.subr.bf16.mxu0 0
        %685 = vmatpush1.bf16.msra.mxu0 %v677
        %686 = vmatprep.subr.bf16.mxu0 0
        %687 = vmatpush1.bf16.msra.mxu0 %v678
        %688 = vmatprep.subr.bf16.mxu0 0
        %689 = vmatpush1.bf16.msra.mxu0 0
        %690 = vmatprep.subr.bf16.mxu0 0
        %691 = vmatpush1.bf16.msra.mxu0 0
        %692 = vmatprep.subr.bf16.mxu0 0
        %693 = vmatpush1.bf16.msra.mxu0 0
        %694 = vmatprep.subr.bf16.mxu0 0
        %695 = vmatpush1.bf16.msra.mxu0 0
        %696 = vmatprep.subr.bf16.mxu0 0
        %697 = vmatpush1.bf16.msra.mxu0 0
        %698 = vmatprep.subr.bf16.mxu0 0
        %699 = vmatpush1.bf16.msra.mxu0 0
        %700 = vmatprep.subr.bf16.mxu0 0
        %701 = vmatpush1.bf16.msra.mxu0 0
        %702 = vmatprep.subr.bf16.mxu0 0
        %703 = vmatpush1.bf16.msra.mxu0 0
        %704 = vmatprep.subr.bf16.mxu0 0
        %705 = vmatpush1.bf16.msra.mxu0 0
        %706 = vmatprep.subr.bf16.mxu0 0
        %707 = vmatpush1.bf16.msra.mxu0 0
        %708 = vmatprep.subr.bf16.mxu0 0
        %709 = vmatpush1.bf16.msra.mxu0 0
        %710 = vmatprep.subr.bf16.mxu0 0
        %711 = vmatpush1.bf16.msra.mxu0 0
        %712 = vmatprep.subr.bf16.mxu0 0
        %713 = vmatpush1.bf16.msra.mxu0 0
        %714 = vmatprep.subr.bf16.mxu0 0
        %715 = vmatpush1.bf16.msra.mxu0 0
        %716 = vmatprep.mubr.bf16.mxu0 0
        %717 = vmatmul.mubr.bf16.gmra.mrb[0].mxu0 %v682
        %v718 = vpop.f32.mrb[0].mxu0
        %v719 = vadd.f32 %v667, %v718
        %v720 = vpop.f32.mrb[0].mxu0
        %v721 = vpop.f32.mrb[0].mxu0
        %v722 = vpop.f32.mrb[0].mxu0
        %723 = vdwg.mxu0
        %v724 = vpack.c.bf16 %v591, %v591
        %v725 = vpack.c.bf16 %v653, %v653
        %v726 = vpack.c.bf16 %v719, %v719
        %vm727 = vcmask 64512
        %v729 = vsel %vm727, %v724, 0
        %v732 = vsel %vm727, %v725, 0
        %734 = vmatprep.subr.bf16.mxu0 0
        %735 = vmatpush1.bf16.xpose.msra.mxu0 %v732
        %736 = vmatprep.subr.bf16.mxu0 0
        %737 = vmatpush1.bf16.xpose.msra.mxu0 0
        %738 = vmatprep.subr.bf16.mxu0 0
        %739 = vmatpush1.bf16.xpose.msra.mxu0 0
        %740 = vmatprep.subr.bf16.mxu0 0
        %741 = vmatpush1.bf16.xpose.msra.mxu0 0
        %742 = vmatprep.subr.bf16.mxu0 0
        %743 = vmatpush1.bf16.xpose.msra.mxu0 0
        %744 = vmatprep.subr.bf16.mxu0 0
        %745 = vmatpush1.bf16.xpose.msra.mxu0 0
        %746 = vmatprep.subr.bf16.mxu0 0
        %747 = vmatpush1.bf16.xpose.msra.mxu0 0
        %748 = vmatprep.subr.bf16.mxu0 0
        %749 = vmatpush1.bf16.xpose.msra.mxu0 0
        %750 = vmatprep.subr.bf16.mxu0 0
        %751 = vmatpush1.bf16.xpose.msra.mxu0 0
        %752 = vmatprep.subr.bf16.mxu0 0
        %753 = vmatpush1.bf16.xpose.msra.mxu0 0
        %754 = vmatprep.subr.bf16.mxu0 0
        %755 = vmatpush1.bf16.xpose.msra.mxu0 0
        %756 = vmatprep.subr.bf16.mxu0 0
        %757 = vmatpush1.bf16.xpose.msra.mxu0 0
        %758 = vmatprep.subr.bf16.mxu0 0
        %759 = vmatpush1.bf16.xpose.msra.mxu0 0
        %760 = vmatprep.subr.bf16.mxu0 0
        %761 = vmatpush1.bf16.xpose.msra.mxu0 0
        %762 = vmatprep.subr.bf16.mxu0 0
        %763 = vmatpush1.bf16.xpose.msra.mxu0 0
        %764 = vmatprep.subr.bf16.mxu0 0
        %765 = vmatpush1.bf16.xpose.msra.mxu0 0
        %766 = vmatprep.mubr.bf16.mxu0 0
        %767 = vmatmul.mubr.bf16.gmra.mrb[0].mxu0 %v729
        %v768 = vpop.f32.mrb[0].mxu0
        %v769 = vadd.f32 0.0, %v768
        %v770 = vpop.f32.mrb[0].mxu0
        %v771 = vpop.f32.mrb[0].mxu0
        %v772 = vpop.f32.mrb[0].mxu0
        %773 = vdwg.mxu0
        %v774 = vsel %vm727, %v769, -inf
        %775 = vmax.xlane.f32.xlu0 %v774
        %v776 = vpop.xlane.xlu0 %775
        %v777 = vsub.f32 %v769, %v776
        %v778 = vmul.f32 %v777, 1.442695
        %v779 = vpow.pop %v778
        %v780 = vsel %vm727, %v779, 0.0
        %781 = vadd.xlane.f32.xlu0 %v780
        %v782 = vpop.xlane.xlu0 %781
        %v783 = vrcp.pop %v782
        %v784 = vmul.f32 %v779, %v783
        %v785 = vpack.c.bf16 %v784, %v784
        %v787 = vsel %vm727, %v785, 0
        %vm789 = vcmask 1043456
        %v791 = vsel %vm789, %v726, 0
        %793 = vmatprep.subr.bf16.mxu0 0
        %794 = vmatpush1.bf16.msra.mxu0 %v791
        %795 = vmatprep.subr.bf16.mxu0 0
        %796 = vmatpush1.bf16.msra.mxu0 0
        %797 = vmatprep.subr.bf16.mxu0 0
        %798 = vmatpush1.bf16.msra.mxu0 0
        %799 = vmatprep.subr.bf16.mxu0 0
        %800 = vmatpush1.bf16.msra.mxu0 0
        %801 = vmatprep.subr.bf16.mxu0 0
        %802 = vmatpush1.bf16.msra.mxu0 0
        %803 = vmatprep.subr.bf16.mxu0 0
        %804 = vmatpush1.bf16.msra.mxu0 0
        %805 = vmatprep.subr.bf16.mxu0 0
        %806 = vmatpush1.bf16.msra.mxu0 0
        %807 = vmatprep.subr.bf16.mxu0 0
        %808 = vmatpush1.bf16.msra.mxu0 0
        %809 = vmatprep.subr.bf16.mxu0 0
        %810 = vmatpush1.bf16.msra.mxu0 0
        %811 = vmatprep.subr.bf16.mxu0 0
        %812 = vmatpush1.bf16.msra.mxu0 0
        %813 = vmatprep.subr.bf16.mxu0 0
        %814 = vmatpush1.bf16.msra.mxu0 0
        %815 = vmatprep.subr.bf16.mxu0 0
        %816 = vmatpush1.bf16.msra.mxu0 0
        %817 = vmatprep.subr.bf16.mxu0 0
        %818 = vmatpush1.bf16.msra.mxu0 0
        %819 = vmatprep.subr.bf16.mxu0 0
        %820 = vmatpush1.bf16.msra.mxu0 0
        %821 = vmatprep.subr.bf16.mxu0 0
        %822 = vmatpush1.bf16.msra.mxu0 0
        %823 = vmatprep.subr.bf16.mxu0 0
        %824 = vmatpush1.bf16.msra.mxu0 0
        %825 = vmatprep.mubr.bf16.mxu0 0
        %826 = vmatmul.mubr.bf16.gmra.mrb[0].mxu0 %v787
        %v827 = vpop.f32.mrb[0].mxu0
        %v828 = vadd.f32 0.0, %v827
        %v829 = vpop.f32.mrb[0].mxu0
        %v830 = vpop.f32.mrb[0].mxu0
        %v831 = vpop.f32.mrb[0].mxu0
        %832 = vdwg.mxu0
        %833 = vst.msk [vmem:[#allocation2] sm:$0xff] %vm727, %v828
        %835 = vrot.lane.b32.xlu0 %v724, 120
        %v836 = vpop.permute.xlu0 %835
        %838 = vrot.lane.b32.xlu0 %v725, 120
        %v839 = vpop.permute.xlu0 %838
        %v841 = vsel %vm727, %v836, 0
        %v844 = vsel %vm727, %v839, 0
        %846 = vmatprep.subr.bf16.mxu0 0
        %847 = vmatpush1.bf16.xpose.msra.mxu0 %v844
        %848 = vmatprep.subr.bf16.mxu0 0
        %849 = vmatpush1.bf16.xpose.msra.mxu0 0
        %850 = vmatprep.subr.bf16.mxu0 0
        %851 = vmatpush1.bf16.xpose.msra.mxu0 0
        %852 = vmatprep.subr.bf16.mxu0 0
        %853 = vmatpush1.bf16.xpose.msra.mxu0 0
        %854 = vmatprep.subr.bf16.mxu0 0
        %855 = vmatpush1.bf16.xpose.msra.mxu0 0
        %856 = vmatprep.subr.bf16.mxu0 0
        %857 = vmatpush1.bf16.xpose.msra.mxu0 0
        %858 = vmatprep.subr.bf16.mxu0 0
        %859 = vmatpush1.bf16.xpose.msra.mxu0 0
        %860 = vmatprep.subr.bf16.mxu0 0
        %861 = vmatpush1.bf16.xpose.msra.mxu0 0
        %862 = vmatprep.subr.bf16.mxu0 0
        %863 = vmatpush1.bf16.xpose.msra.mxu0 0
        %864 = vmatprep.subr.bf16.mxu0 0
        %865 = vmatpush1.bf16.xpose.msra.mxu0 0
        %866 = vmatprep.subr.bf16.mxu0 0
        %867 = vmatpush1.bf16.xpose.msra.mxu0 0
        %868 = vmatprep.subr.bf16.mxu0 0
        %869 = vmatpush1.bf16.xpose.msra.mxu0 0
        %870 = vmatprep.subr.bf16.mxu0 0
        %871 = vmatpush1.bf16.xpose.msra.mxu0 0
        %872 = vmatprep.subr.bf16.mxu0 0
        %873 = vmatpush1.bf16.xpose.msra.mxu0 0
        %874 = vmatprep.subr.bf16.mxu0 0
        %875 = vmatpush1.bf16.xpose.msra.mxu0 0
        %876 = vmatprep.subr.bf16.mxu0 0
        %877 = vmatpush1.bf16.xpose.msra.mxu0 0
        %878 = vmatprep.mubr.bf16.mxu0 0
        %879 = vmatmul.mubr.bf16.gmra.mrb[0].mxu0 %v841
        %v880 = vpop.f32.mrb[0].mxu0
        %v881 = vadd.f32 0.0, %v880
        %v882 = vpop.f32.mrb[0].mxu0
        %v883 = vpop.f32.mrb[0].mxu0
        %v884 = vpop.f32.mrb[0].mxu0
        %885 = vdwg.mxu0
        %v886 = vsel %vm727, %v881, -inf
        %887 = vmax.xlane.f32.xlu0 %v886
        %v888 = vpop.xlane.xlu0 %887
        %v889 = vsub.f32 %v881, %v888
        %v890 = vmul.f32 %v889, 1.442695
        %v891 = vpow.pop %v890
        %v892 = vsel %vm727, %v891, 0.0
        %893 = vadd.xlane.f32.xlu0 %v892
        %v894 = vpop.xlane.xlu0 %893
        %v895 = vrcp.pop %v894
        %v896 = vmul.f32 %v891, %v895
        %v897 = vpack.c.bf16 %v896, %v896
        %899 = vrot.lane.b32.xlu0 %v726, 120
        %v900 = vpop.permute.xlu0 %899
        %v902 = vsel %vm727, %v897, 0
        %v905 = vsel %vm789, %v900, 0
        %907 = vmatprep.subr.bf16.mxu0 0
        %908 = vmatpush1.bf16.msra.mxu0 %v905
        %909 = vmatprep.subr.bf16.mxu0 0
        %910 = vmatpush1.bf16.msra.mxu0 0
        %911 = vmatprep.subr.bf16.mxu0 0
        %912 = vmatpush1.bf16.msra.mxu0 0
        %913 = vmatprep.subr.bf16.mxu0 0
        %914 = vmatpush1.bf16.msra.mxu0 0
        %915 = vmatprep.subr.bf16.mxu0 0
        %916 = vmatpush1.bf16.msra.mxu0 0
        %917 = vmatprep.subr.bf16.mxu0 0
        %918 = vmatpush1.bf16.msra.mxu0 0
        %919 = vmatprep.subr.bf16.mxu0 0
        %920 = vmatpush1.bf16.msra.mxu0 0
        %921 = vmatprep.subr.bf16.mxu0 0
        %922 = vmatpush1.bf16.msra.mxu0 0
        %923 = vmatprep.subr.bf16.mxu0 0
        %924 = vmatpush1.bf16.msra.mxu0 0
        %925 = vmatprep.subr.bf16.mxu0 0
        %926 = vmatpush1.bf16.msra.mxu0 0
        %927 = vmatprep.subr.bf16.mxu0 0
        %928 = vmatpush1.bf16.msra.mxu0 0
        %929 = vmatprep.subr.bf16.mxu0 0
        %930 = vmatpush1.bf16.msra.mxu0 0
        %931 = vmatprep.subr.bf16.mxu0 0
        %932 = vmatpush1.bf16.msra.mxu0 0
        %933 = vmatprep.subr.bf16.mxu0 0
        %934 = vmatpush1.bf16.msra.mxu0 0
        %935 = vmatprep.subr.bf16.mxu0 0
        %936 = vmatpush1.bf16.msra.mxu0 0
        %937 = vmatprep.subr.bf16.mxu0 0
        %938 = vmatpush1.bf16.msra.mxu0 0
        %939 = vmatprep.mubr.bf16.mxu0 0
        %940 = vmatmul.mubr.bf16.gmra.mrb[0].mxu0 %v902
        %v941 = vpop.f32.mrb[0].mxu0
        %v942 = vadd.f32 0.0, %v941
        %v943 = vpop.f32.mrb[0].mxu0
        %v944 = vpop.f32.mrb[0].mxu0
        %v945 = vpop.f32.mrb[0].mxu0
        %946 = vdwg.mxu0
        %948 = vrot.lane.b32.xlu0 %v942, 8
        %v949 = vpop.permute.xlu0 %948
        %vm951 = vcmask 130112
        %952 = vst.msk [vmem:[#allocation2] sm:$0xff] %vm951, %v949
        %953 = vrot.lane.b32.xlu0 %v724, 112
        %v954 = vpop.permute.xlu0 %953
        %955 = vrot.lane.b32.xlu0 %v725, 112
        %v956 = vpop.permute.xlu0 %955
        %v958 = vsel %vm727, %v954, 0
        %v961 = vsel %vm727, %v956, 0
        %963 = vmatprep.subr.bf16.mxu0 0
        %964 = vmatpush1.bf16.xpose.msra.mxu0 %v961
        %965 = vmatprep.subr.bf16.mxu0 0
        %966 = vmatpush1.bf16.xpose.msra.mxu0 0
        %967 = vmatprep.subr.bf16.mxu0 0
        %968 = vmatpush1.bf16.xpose.msra.mxu0 0
        %969 = vmatprep.subr.bf16.mxu0 0
        %970 = vmatpush1.bf16.xpose.msra.mxu0 0
        %971 = vmatprep.subr.bf16.mxu0 0
        %972 = vmatpush1.bf16.xpose.msra.mxu0 0
        %973 = vmatprep.subr.bf16.mxu0 0
        %974 = vmatpush1.bf16.xpose.msra.mxu0 0
        %975 = vmatprep.subr.bf16.mxu0 0
        %976 = vmatpush1.bf16.xpose.msra.mxu0 0
        %977 = vmatprep.subr.bf16.mxu0 0
        %978 = vmatpush1.bf16.xpose.msra.mxu0 0
        %979 = vmatprep.subr.bf16.mxu0 0
        %980 = vmatpush1.bf16.xpose.msra.mxu0 0
        %981 = vmatprep.subr.bf16.mxu0 0
        %982 = vmatpush1.bf16.xpose.msra.mxu0 0
        %983 = vmatprep.subr.bf16.mxu0 0
        %984 = vmatpush1.bf16.xpose.msra.mxu0 0
        %985 = vmatprep.subr.bf16.mxu0 0
        %986 = vmatpush1.bf16.xpose.msra.mxu0 0
        %987 = vmatprep.subr.bf16.mxu0 0
        %988 = vmatpush1.bf16.xpose.msra.mxu0 0
        %989 = vmatprep.subr.bf16.mxu0 0
        %990 = vmatpush1.bf16.xpose.msra.mxu0 0
        %991 = vmatprep.subr.bf16.mxu0 0
        %992 = vmatpush1.bf16.xpose.msra.mxu0 0
        %993 = vmatprep.subr.bf16.mxu0 0
        %994 = vmatpush1.bf16.xpose.msra.mxu0 0
        %995 = vmatprep.mubr.bf16.mxu0 0
        %996 = vmatmul.mubr.bf16.gmra.mrb[0].mxu0 %v958
        %v997 = vpop.f32.mrb[0].mxu0
        %v998 = vadd.f32 0.0, %v997
        %v999 = vpop.f32.mrb[0].mxu0
        %v1000 = vpop.f32.mrb[0].mxu0
        %v1001 = vpop.f32.mrb[0].mxu0
        %1002 = vdwg.mxu0
        %v1003 = vsel %vm727, %v998, -inf
        %1004 = vmax.xlane.f32.xlu0 %v1003
        %v1005 = vpop.xlane.xlu0 %1004
        %v1006 = vsub.f32 %v998, %v1005
        %v1007 = vmul.f32 %v1006, 1.442695
        %v1008 = vpow.pop %v1007
        %v1009 = vsel %vm727, %v1008, 0.0
        %1010 = vadd.xlane.f32.xlu0 %v1009
        %v1011 = vpop.xlane.xlu0 %1010
        %v1012 = vrcp.pop %v1011
        %v1013 = vmul.f32 %v1008, %v1012
        %v1014 = vpack.c.bf16 %v1013, %v1013
        %1015 = vrot.lane.b32.xlu0 %v726, 112
        %v1016 = vpop.permute.xlu0 %1015
        %v1018 = vsel %vm727, %v1014, 0
        %v1021 = vsel %vm789, %v1016, 0
        %1023 = vmatprep.subr.bf16.mxu0 0
        %1024 = vmatpush1.bf16.msra.mxu0 %v1021
        %1025 = vmatprep.subr.bf16.mxu0 0
        %1026 = vmatpush1.bf16.msra.mxu0 0
        %1027 = vmatprep.subr.bf16.mxu0 0
        %1028 = vmatpush1.bf16.msra.mxu0 0
        %1029 = vmatprep.subr.bf16.mxu0 0
        %1030 = vmatpush1.bf16.msra.mxu0 0
        %1031 = vmatprep.subr.bf16.mxu0 0
        %1032 = vmatpush1.bf16.msra.mxu0 0
        %1033 = vmatprep.subr.bf16.mxu0 0
        %1034 = vmatpush1.bf16.msra.mxu0 0
        %1035 = vmatprep.subr.bf16.mxu0 0
        %1036 = vmatpush1.bf16.msra.mxu0 0
        %1037 = vmatprep.subr.bf16.mxu0 0
        %1038 = vmatpush1.bf16.msra.mxu0 0
        %1039 = vmatprep.subr.bf16.mxu0 0
        %1040 = vmatpush1.bf16.msra.mxu0 0
        %1041 = vmatprep.subr.bf16.mxu0 0
        %1042 = vmatpush1.bf16.msra.mxu0 0
        %1043 = vmatprep.subr.bf16.mxu0 0
        %1044 = vmatpush1.bf16.msra.mxu0 0
        %1045 = vmatprep.subr.bf16.mxu0 0
        %1046 = vmatpush1.bf16.msra.mxu0 0
        %1047 = vmatprep.subr.bf16.mxu0 0
        %1048 = vmatpush1.bf16.msra.mxu0 0
        %1049 = vmatprep.subr.bf16.mxu0 0
        %1050 = vmatpush1.bf16.msra.mxu0 0
        %1051 = vmatprep.subr.bf16.mxu0 0
        %1052 = vmatpush1.bf16.msra.mxu0 0
        %1053 = vmatprep.subr.bf16.mxu0 0
        %1054 = vmatpush1.bf16.msra.mxu0 0
        %1055 = vmatprep.mubr.bf16.mxu0 0
        %1056 = vmatmul.mubr.bf16.gmra.mrb[0].mxu0 %v1018
        %v1057 = vpop.f32.mrb[0].mxu0
        %v1058 = vadd.f32 0.0, %v1057
        %v1059 = vpop.f32.mrb[0].mxu0
        %v1060 = vpop.f32.mrb[0].mxu0
        %v1061 = vpop.f32.mrb[0].mxu0
        %1062 = vdwg.mxu0
        %1064 = vrot.lane.b32.xlu0 %v1058, 16
        %v1065 = vpop.permute.xlu0 %1064
        %vm1067 = vcmask 195712
        %1068 = vst.msk [vmem:[#allocation2] sm:$0xff] %vm1067, %v1065
        %1069 = vrot.lane.b32.xlu0 %v724, 104
        %v1070 = vpop.permute.xlu0 %1069
        %1071 = vrot.lane.b32.xlu0 %v725, 104
        %v1072 = vpop.permute.xlu0 %1071
        %v1074 = vsel %vm727, %v1070, 0
        %v1077 = vsel %vm727, %v1072, 0
        %1079 = vmatprep.subr.bf16.mxu0 0
        %1080 = vmatpush1.bf16.xpose.msra.mxu0 %v1077
        %1081 = vmatprep.subr.bf16.mxu0 0
        %1082 = vmatpush1.bf16.xpose.msra.mxu0 0
        %1083 = vmatprep.subr.bf16.mxu0 0
        %1084 = vmatpush1.bf16.xpose.msra.mxu0 0
        %1085 = vmatprep.subr.bf16.mxu0 0
        %1086 = vmatpush1.bf16.xpose.msra.mxu0 0
        %1087 = vmatprep.subr.bf16.mxu0 0
        %1088 = vmatpush1.bf16.xpose.msra.mxu0 0
        %1089 = vmatprep.subr.bf16.mxu0 0
        %1090 = vmatpush1.bf16.xpose.msra.mxu0 0
        %1091 = vmatprep.subr.bf16.mxu0 0
        %1092 = vmatpush1.bf16.xpose.msra.mxu0 0
        %1093 = vmatprep.subr.bf16.mxu0 0
        %1094 = vmatpush1.bf16.xpose.msra.mxu0 0
        %1095 = vmatprep.subr.bf16.mxu0 0
        %1096 = vmatpush1.bf16.xpose.msra.mxu0 0
        %1097 = vmatprep.subr.bf16.mxu0 0
        %1098 = vmatpush1.bf16.xpose.msra.mxu0 0
        %1099 = vmatprep.subr.bf16.mxu0 0
        %1100 = vmatpush1.bf16.xpose.msra.mxu0 0
        %1101 = vmatprep.subr.bf16.mxu0 0
        %1102 = vmatpush1.bf16.xpose.msra.mxu0 0
        %1103 = vmatprep.subr.bf16.mxu0 0
        %1104 = vmatpush1.bf16.xpose.msra.mxu0 0
        %1105 = vmatprep.subr.bf16.mxu0 0
        %1106 = vmatpush1.bf16.xpose.msra.mxu0 0
        %1107 = vmatprep.subr.bf16.mxu0 0
        %1108 = vmatpush1.bf16.xpose.msra.mxu0 0
        %1109 = vmatprep.subr.bf16.mxu0 0
        %1110 = vmatpush1.bf16.xpose.msra.mxu0 0
        %1111 = vmatprep.mubr.bf16.mxu0 0
        %1112 = vmatmul.mubr.bf16.gmra.mrb[0].mxu0 %v1074
        %v1113 = vpop.f32.mrb[0].mxu0
        %v1114 = vadd.f32 0.0, %v1113
        %v1115 = vpop.f32.mrb[0].mxu0
        %v1116 = vpop.f32.mrb[0].mxu0
        %v1117 = vpop.f32.mrb[0].mxu0
        %1118 = vdwg.mxu0
        %v1119 = vsel %vm727, %v1114, -inf
        %1120 = vmax.xlane.f32.xlu0 %v1119
        %v1121 = vpop.xlane.xlu0 %1120
        %v1122 = vsub.f32 %v1114, %v1121
        %v1123 = vmul.f32 %v1122, 1.442695
        %v1124 = vpow.pop %v1123
        %v1125 = vsel %vm727, %v1124, 0.0
        %1126 = vadd.xlane.f32.xlu0 %v1125
        %v1127 = vpop.xlane.xlu0 %1126
        %v1128 = vrcp.pop %v1127
        %v1129 = vmul.f32 %v1124, %v1128
        %v1130 = vpack.c.bf16 %v1129, %v1129
        %1131 = vrot.lane.b32.xlu0 %v726, 104
        %v1132 = vpop.permute.xlu0 %1131
        %v1134 = vsel %vm727, %v1130, 0
        %v1137 = vsel %vm789, %v1132, 0
        %1139 = vmatprep.subr.bf16.mxu0 0
        %1140 = vmatpush1.bf16.msra.mxu0 %v1137
        %1141 = vmatprep.subr.bf16.mxu0 0
        %1142 = vmatpush1.bf16.msra.mxu0 0
        %1143 = vmatprep.subr.bf16.mxu0 0
        %1144 = vmatpush1.bf16.msra.mxu0 0
        %1145 = vmatprep.subr.bf16.mxu0 0
        %1146 = vmatpush1.bf16.msra.mxu0 0
        %1147 = vmatprep.subr.bf16.mxu0 0
        %1148 = vmatpush1.bf16.msra.mxu0 0
        %1149 = vmatprep.subr.bf16.mxu0 0
        %1150 = vmatpush1.bf16.msra.mxu0 0
        %1151 = vmatprep.subr.bf16.mxu0 0
        %1152 = vmatpush1.bf16.msra.mxu0 0
        %1153 = vmatprep.subr.bf16.mxu0 0
        %1154 = vmatpush1.bf16.msra.mxu0 0
        %1155 = vmatprep.subr.bf16.mxu0 0
        %1156 = vmatpush1.bf16.msra.mxu0 0
        %1157 = vmatprep.subr.bf16.mxu0 0
        %1158 = vmatpush1.bf16.msra.mxu0 0
        %1159 = vmatprep.subr.bf16.mxu0 0
        %1160 = vmatpush1.bf16.msra.mxu0 0
        %1161 = vmatprep.subr.bf16.mxu0 0
        %1162 = vmatpush1.bf16.msra.mxu0 0
        %1163 = vmatprep.subr.bf16.mxu0 0
        %1164 = vmatpush1.bf16.msra.mxu0 0
        %1165 = vmatprep.subr.bf16.mxu0 0
        %1166 = vmatpush1.bf16.msra.mxu0 0
        %1167 = vmatprep.subr.bf16.mxu0 0
        %1168 = vmatpush1.bf16.msra.mxu0 0
        %1169 = vmatprep.subr.bf16.mxu0 0
        %1170 = vmatpush1.bf16.msra.mxu0 0
        %1171 = vmatprep.mubr.bf16.mxu0 0
        %1172 = vmatmul.mubr.bf16.gmra.mrb[0].mxu0 %v1134
        %v1173 = vpop.f32.mrb[0].mxu0
        %v1174 = vadd.f32 0.0, %v1173
        %v1175 = vpop.f32.mrb[0].mxu0
        %v1176 = vpop.f32.mrb[0].mxu0
        %v1177 = vpop.f32.mrb[0].mxu0
        %1178 = vdwg.mxu0
        %1180 = vrot.lane.b32.xlu0 %v1174, 24
        %v1181 = vpop.permute.xlu0 %1180
        %vm1183 = vcmask 261312
        %1184 = vst.msk [vmem:[#allocation2] sm:$0xff] %vm1183, %v1181
        %v1185 = vld [vmem:[#allocation2] sm:$0xff]
        %v1186 = vpack.c.bf16 %v1185, %v1185
        %v1187 = vld [vmem:[#allocation12] sm:$0xf]
        %v1188 = vld [vmem:[#allocation12 + $0x4] sm:$0xf]
        %v1189 = vld [vmem:[#allocation12 + $0x8] sm:$0xf]
        %v1190 = vld [vmem:[#allocation12 + $0xc] sm:$0xf]
        %v1191 = vld [vmem:[%s10] sm:$0x1]
        %v1193 = vlaneseq
        %v1194 = vshrl.u32 %v1193, 7
        %v1195 = vsub.s32 0, %v1194
        %v1196 = vrot.slane %v1191, %v1195
        %v1202 = vunpack.c.l.b16 %v1187
        %v1203 = vunpack.c.l.b16 %v1188
        %v1204 = vunpack.c.l.b16 %v1189
        %v1205 = vunpack.c.l.b16 %v1190
        %v1206 = vpack.c.b16 %v1203, %v1202
        %v1207 = vpack.c.b16 %v1205, %v1204
        %v1211 = vsel %vm547, %v1186, 0
        %1213 = vmatprep.subr.bf16.mxu0 0
        %1214 = vmatpush1.bf16.msra.mxu0 %v1206
        %1215 = vmatprep.subr.bf16.mxu0 0
        %1216 = vmatpush1.bf16.msra.mxu0 %v1207
        %1217 = vmatprep.subr.bf16.mxu0 0
        %1218 = vmatpush1.bf16.msra.mxu0 0
        %1219 = vmatprep.subr.bf16.mxu0 0
        %1220 = vmatpush1.bf16.msra.mxu0 0
        %1221 = vmatprep.subr.bf16.mxu0 0
        %1222 = vmatpush1.bf16.msra.mxu0 0
        %1223 = vmatprep.subr.bf16.mxu0 0
        %1224 = vmatpush1.bf16.msra.mxu0 0
        %1225 = vmatprep.subr.bf16.mxu0 0
        %1226 = vmatpush1.bf16.msra.mxu0 0
        %1227 = vmatprep.subr.bf16.mxu0 0
        %1228 = vmatpush1.bf16.msra.mxu0 0
        %1229 = vmatprep.subr.bf16.mxu0 0
        %1230 = vmatpush1.bf16.msra.mxu0 0
        %1231 = vmatprep.subr.bf16.mxu0 0
        %1232 = vmatpush1.bf16.msra.mxu0 0
        %1233 = vmatprep.subr.bf16.mxu0 0
        %1234 = vmatpush1.bf16.msra.mxu0 0
        %1235 = vmatprep.subr.bf16.mxu0 0
        %1236 = vmatpush1.bf16.msra.mxu0 0
        %1237 = vmatprep.subr.bf16.mxu0 0
        %1238 = vmatpush1.bf16.msra.mxu0 0
        %1239 = vmatprep.subr.bf16.mxu0 0
        %1240 = vmatpush1.bf16.msra.mxu0 0
        %1241 = vmatprep.subr.bf16.mxu0 0
        %1242 = vmatpush1.bf16.msra.mxu0 0
        %1243 = vmatprep.subr.bf16.mxu0 0
        %1244 = vmatpush1.bf16.msra.mxu0 0
        %1245 = vmatprep.mubr.bf16.mxu0 0
        %1246 = vmatmul.mubr.bf16.gmra.mrb[0].mxu0 %v1211
        %v1247 = vpop.f32.mrb[0].mxu0
        %v1248 = vadd.f32 %v1196, %v1247
        %v1249 = vpop.f32.mrb[0].mxu0
        %v1250 = vpop.f32.mrb[0].mxu0
        %v1251 = vpop.f32.mrb[0].mxu0
        %1252 = vdwg.mxu0
        %1253 = vst.msk [vmem:[%s516] sm:$0xff] %vm547, %v1248
        %s1254 = sand.u32 %s287, 1
        %s1255 = scalar_lea.sflag [#allocation5], %s1254
        %s1256 = sand.u32 %s287, 1
        %s1257 = smul.addr %s1256, 8
        %s1258 = scalar_lea.vmem [#allocation14], %s1257
        // Predicated region
        $region89: #{tpu_custom_call.1} parent=63 // pred_check
          %p1259 = pneg %p297
        $region90: #{tpu_custom_call.1} parent=63 // pred_check_branch
          %1261 = sbr.rel (%p1259) target = $region92
        $region91: #{tpu_custom_call.1} parent=63 // pred_region
          %s1263 = ssub.s32 128, 128
          %1264 = vsyncadd %s1255, %s1263
          %s1265 = smul.addr %s33, 128
          %s1266 = scalar_lea.hbm %s11, %s1265
          %s1268 = sshll.u32 %s1258, 4
          %s1269 = int_to_ptr.vmem [resolvable:$true] %s1268
          %1271 = dma.vmem_to_hbm [thread:$0]  %s1269, 128, %s1266, %s1255
        $region92: #{tpu_custom_call.1} parent=63 // pred_fallthru
          _
      $region64: #{tpu_custom_call.1} parent=5 // pred_fallthru
        _
      %p1272 = scmp.le.s32.totalorder 2, %s28
      // Predicated region
      $region93: #{tpu_custom_call.1} parent=5 // pred_check
        %p1273 = pneg %p1272
      $region94: #{tpu_custom_call.1} parent=5 // pred_check_branch
        %1275 = sbr.rel (%p1273) target = $region96
      $region95: #{tpu_custom_call.1} parent=5 // pred_region
        %s1276 = ssub.s32 %s28, 2
        // Predicated region
        $region97: #{tpu_custom_call.1} parent=95 // pred_check
          %p1277 = pneg %p303
        $region98: #{tpu_custom_call.1} parent=95 // pred_check_branch
          %1279 = sbr.rel (%p1277) target = $region100
        $region99: #{tpu_custom_call.1} parent=95 // pred_region
          %s1280 = sand.u32 %s288, 1
          %s1281 = scalar_lea.sflag [#allocation5], %s1280
          %s1282 = sand.u32 %s288, 1
          %s1283 = smul.addr %s1282, 8
          %s1284 = scalar_lea.vmem [#allocation14], %s1283
          %1285 = dma.done %s1281, 128
        $region100: #{tpu_custom_call.1} parent=95 // pred_fallthru
          _
      $region96: #{tpu_custom_call.1} parent=5 // pred_fallthru
        _
    $region6: #{tpu_custom_call.1} parent=1 // loop_footer
      %s32 = sadd.s32 1, %s28
    $region7: #{tpu_custom_call.1} parent=1 // loop_footer_branch
      %27 = sbr.rel target = $region3
    $region8: #{tpu_custom_call.1} parent=1 // loop_exit
      _
    %1286 = vsyncpa [#allocation4], 1
    %s1287 = scalar_lea.sflag [#allocation4], 1
    %1288 = vsyncpa %s1287, 1
    %1289 = vsyncpa [#allocation7], 1
    %s1290 = scalar_lea.sflag [#allocation7], 1
    %1291 = vsyncpa %s1290, 1
    %1292 = vsyncpa [#allocation10], 1
    %1293 = vsyncpa [#allocation13], 1
    %1294 = vsyncpa [#allocation5], 1
    %s1295 = scalar_lea.sflag [#allocation5], 1
    %1296 = vsyncpa %s1295, 1

</llo_original>
